<compile_context>
chip_gen: v5e
topology: v5e:2x2
jax: 0.10.0
libtpu: 0.0.40
codegen_flags: <defaults>
</compile_context>

<pallas_src>
import functools

import numpy as np
import jax
import jax.numpy as jnp
from jax import lax
from jax.experimental import pallas as pl
from jax.experimental.pallas import tpu as pltpu


def _round_up(x, m):
    return (x + m - 1) // m * m


def _causalty_review_kernel(TB, Kd, Kp, Ks,
                            params_ref, didx_ref, pidx_ref, sidx_ref,
                            pre_ref, e_dm_ref, e_pm_ref, e_sm_ref,
                            out_ref, adj_ref):
    """One grid step reviews TB visits.

    params: [low_d, low_p, low_s, high_d, high_p, high_s, -minus_w, +plus_w]
    *_idx : flat (Bp*K,) int32 in SMEM, padded with -1 sentinels.
    """
    blk = pl.program_id(0)
    base = blk * TB

    # Threshold scalars read once per block (hoisted out of the visit loop).
    low_d, low_p, low_s = params_ref[0], params_ref[1], params_ref[2]
    high_d, high_p, high_s = params_ref[3], params_ref[4], params_ref[5]
    neg_minus_w, plus_w = params_ref[6], params_ref[7]

    # Full-table loads and row-id iotas, hoisted (tables are small, VMEM-resident).
    e_dm = e_dm_ref[...]
    e_pm = e_pm_ref[...]
    e_sm = e_sm_ref[...]
    dm_ids = lax.broadcasted_iota(jnp.int32, (e_dm.shape[0], 1), 0)
    pm_ids = lax.broadcasted_iota(jnp.int32, (e_pm.shape[0], 1), 0)
    sm_ids = lax.broadcasted_iota(jnp.int32, (e_sm.shape[0], 1), 0)

    def masked_max(e, row_ids, idx_ref, off, K):
        # Membership mask over table rows; -1 sentinels never match, so padded
        # list entries (and fully empty lists) contribute nothing.  Non-member
        # rows are forced to 0.0, matching the reference `max_cXm = 0.0`
        # starting value exactly.
        mask = jnp.zeros(row_ids.shape, jnp.bool_)
        for k in range(K):                      # K is tiny (<= ~8), static
            mask = mask | (row_ids == idx_ref[off + k])
        return jnp.max(jnp.where(mask, e, 0.0), axis=0, keepdims=True)

    # Statically unrolled visit loop -> static sublane offsets for scratch writes.
    for j in range(TB):
        v = base + j
        max_cdm = masked_max(e_dm, dm_ids, didx_ref, v * Kd, Kd)
        max_cpm = masked_max(e_pm, pm_ids, pidx_ref, v * Kp, Kp)
        max_csm = masked_max(e_sm, sm_ids, sidx_ref, v * Ks, Ks)
        cond_low = (max_cdm < low_d) & (max_cpm < low_p) & (max_csm < low_s)
        cond_high = (max_cdm > high_d) | (max_cpm > high_p) | (max_csm > high_s)
        # if / elif semantics: low-branch wins, else high-branch, else unchanged.
        adj = jnp.where(cond_low, neg_minus_w, jnp.where(cond_high, plus_w, 0.0))
        adj_ref[pl.ds(j, 1), :] = adj

    # One full-tile (TB, Mp) unmasked store.
    out_ref[...] = pre_ref[...] + adj_ref[...]


def prepare_causalty_review(e_dm, e_pm, e_sm, low_limit, high_limit,
                            minus_weight, plus_weight, num_med):
    """Static preprocessing done once at model init (hoisted out of forward)."""
    Mp = _round_up(num_med, 128)

    def pad_table(e):
        e = jnp.asarray(e, jnp.float32)
        n, m = e.shape
        return jnp.pad(e, ((0, _round_up(max(n, 8), 8) - n), (0, Mp - m)))

    params = jnp.concatenate([
        jnp.asarray(low_limit, jnp.float32).reshape(3),
        jnp.asarray(high_limit, jnp.float32).reshape(3),
        jnp.array([-float(minus_weight), float(plus_weight)], jnp.float32),
    ])
    return dict(e_dm=pad_table(e_dm), e_pm=pad_table(e_pm), e_sm=pad_table(e_sm),
                params=params, num_med=num_med, Mp=Mp)


def causalty_review(prepared, pre_prob, diag_idx, proc_idx, sym_idx):
    """Batched causal review.

    pre_prob : (B, M) f32
    *_idx    : (B, K) int32 padded index lists (-1 = padding sentinel)
    """
    B, M = pre_prob.shape
    Mp = prepared["Mp"]
    Kd, Kp, Ks = diag_idx.shape[1], proc_idx.shape[1], sym_idx.shape[1]

    # Visits per grid step: sublane-aligned, capped, and chosen so the grid
    # keeps >= 2 steps when possible (both TensorCores busy on v7x).
    TB = max(8, min(64, _round_up(pl.cdiv(B, 2), 8)))
    Bp = _round_up(B, TB)
    grid = Bp // TB

    pre_p = jnp.pad(pre_prob.astype(jnp.float32), ((0, Bp - B), (0, Mp - M)))

    def pad_idx(idx):
        idx = jnp.asarray(idx, jnp.int32)
        return jnp.pad(idx, ((0, Bp - B), (0, 0)), constant_values=-1).reshape(-1)

    didx, pidx, sidx = pad_idx(diag_idx), pad_idx(proc_idx), pad_idx(sym_idx)

    e_dm_p, e_pm_p, e_sm_p = prepared["e_dm"], prepared["e_pm"], prepared["e_sm"]
    kernel = functools.partial(_causalty_review_kernel, TB, Kd, Kp, Ks)

    grid_spec = pltpu.PrefetchScalarGridSpec(
        num_scalar_prefetch=4,                 # params, didx, pidx, sidx -> SMEM
        grid=(grid,),
        in_specs=[
            pl.BlockSpec((TB, Mp), lambda b, *_: (b, 0)),      # per-block visits
            # Constant-index specs: tables DMA'd once, resident across grid.
            # TODO(synk): for large production tables use memory_space=pl.ANY +
            # per-visit row DMA (and/or bf16 storage, pl.Buffered(1)) to respect
            # v7x's 64 MiB / v5e's 16 MiB scoped VMEM.
            pl.BlockSpec(e_dm_p.shape, lambda b, *_: (0, 0)),
            pl.BlockSpec(e_pm_p.shape, lambda b, *_: (0, 0)),
            pl.BlockSpec(e_sm_p.shape, lambda b, *_: (0, 0)),
        ],
        out_specs=pl.BlockSpec((TB, Mp), lambda b, *_: (b, 0)),
        scratch_shapes=[pltpu.VMEM((TB, Mp), jnp.float32)],
    )

    out = pl.pallas_call(
        kernel,
        out_shape=jax.ShapeDtypeStruct((Bp, Mp), jnp.float32),
        grid_spec=grid_spec,
        compiler_params=pltpu.CompilerParams(
            dimension_semantics=("parallel",)),      # visit blocks across TCs
    )(prepared["params"], didx, pidx, sidx, pre_p, e_dm_p, e_pm_p, e_sm_p)

    return out[:B, :M]


def reference_jax(pre_prob, e_dm, e_pm, e_sm, diag_lists, proc_lists, sym_lists,
                  low_limit, high_limit, minus_weight, plus_weight):
    """Plain-JAX re-implementation of the PyTorch loop, for verification."""
    M = pre_prob.shape[1]

    def mmax(e, idxs):
        if len(idxs) == 0:
            return jnp.zeros((M,), jnp.float32)
        return jnp.maximum(jnp.max(e[jnp.array(idxs)], axis=0), 0.0)

    rows = []
    for b in range(pre_prob.shape[0]):
        max_cdm = mmax(e_dm, diag_lists[b])
        max_cpm = mmax(e_pm, proc_lists[b])
        max_csm = mmax(e_sm, sym_lists[b])
        cond_low = ((max_cdm < low_limit[0]) & (max_cpm < low_limit[1])
                    & (max_csm < low_limit[2]))
        cond_high = ((max_cdm > high_limit[0]) | (max_cpm > high_limit[1])
                     | (max_csm > high_limit[2]))
        adj = jnp.where(cond_low, -minus_weight, jnp.where(cond_high, plus_weight, 0.0))
        rows.append(pre_prob[b] + adj)
    return jnp.stack(rows)


def pad_lists(lists, K):
    arr = np.full((len(lists), K), -1, dtype=np.int32)   # -1 sentinel = "no code"
    for i, l in enumerate(lists):
        arr[i, :len(l)] = np.asarray(l, dtype=np.int32)
    return jnp.asarray(arr)


if __name__ == "__main__":
    key = jax.random.PRNGKey(0)
    k1, k2, k3, k4 = jax.random.split(key, 4)

    B = 16           # visits; TB=8 -> grid of 2 (both TCs busy on v7x)
    num_med = 100    # deliberately not a multiple of 128 to exercise lane padding
    num_diag, num_proc, num_sym = 16, 8, 8
    Kd, Kp, Ks = 6, 4, 4

    # Dense causal-effect tables standing in for casual_graph.get_effect(...)
    e_dm = jax.random.uniform(k1, (num_diag, num_med), dtype=jnp.float32)
    e_pm = jax.random.uniform(k2, (num_proc, num_med), dtype=jnp.float32)
    e_sm = jax.random.uniform(k3, (num_sym, num_med), dtype=jnp.float32)
    pre_prob = jax.random.uniform(k4, (B, num_med), dtype=jnp.float32)

    # Deterministic stand-ins for casual_graph.get_threshold_effect(...)
    low_limit = jnp.array([0.70, 0.75, 0.80], jnp.float32)
    high_limit = jnp.array([0.90, 0.92, 0.95], jnp.float32)
    minus_weight, plus_weight = 0.01, 0.02

    # Deterministic per-visit diag / proc / sym code lists (some sym lists empty)
    rng = np.random.RandomState(0)

    def make_lists(n_items, K, empty_at=()):
        lists = []
        for b in range(B):
            if b in empty_at:
                lists.append([])
                continue
            k = int(rng.randint(1, K + 1))
            lists.append(sorted(rng.choice(n_items, size=k, replace=False).tolist()))
        return lists

    diag_lists = make_lists(num_diag, Kd)
    proc_lists = make_lists(num_proc, Kp)
    sym_lists = make_lists(num_sym, Ks, empty_at=(2, 7))

    diag_idx = pad_lists(diag_lists, Kd)
    proc_idx = pad_lists(proc_lists, Kp)
    sym_idx = pad_lists(sym_lists, Ks)

    prepared = prepare_causalty_review(e_dm, e_pm, e_sm, low_limit, high_limit,
                                       minus_weight, plus_weight, num_med)

    out = causalty_review(prepared, pre_prob, diag_idx, proc_idx, sym_idx)
    out = jax.block_until_ready(out)

    ref = reference_jax(pre_prob, e_dm, e_pm, e_sm, diag_lists, proc_lists, sym_lists,
                        low_limit, high_limit, minus_weight, plus_weight)
    assert out.shape == (B, num_med)
    assert jnp.allclose(out, ref, atol=1e-6), "Pallas kernel mismatch vs reference"

    print("KERNEL_OK")
</pallas_src>

<mosaic_0001>
module attributes {stable_mosaic.version = 11 : i64} {
  func.func @_causalty_review_kernel(%arg0: i32, %arg1: memref<8xf32, #tpu.memory_space<smem>>, %arg2: memref<96xi32, #tpu.memory_space<smem>>, %arg3: memref<64xi32, #tpu.memory_space<smem>>, %arg4: memref<64xi32, #tpu.memory_space<smem>>, %arg5: memref<8x128xf32, #tpu.memory_space<vmem>>, %arg6: memref<16x128xf32, #tpu.memory_space<vmem>>, %arg7: memref<8x128xf32, #tpu.memory_space<vmem>>, %arg8: memref<8x128xf32, #tpu.memory_space<vmem>>, %arg9: memref<8x128xf32, #tpu.memory_space<vmem>>, %arg10: memref<8x128xf32, #tpu.memory_space<vmem>>) attributes {dimension_semantics = [#tpu.dimension_semantics<parallel>], iteration_bounds = array<i64: 2>, scalar_prefetch = 4 : i64, scratch_operands = 1 : i64, tpu.core_type = #tpu.core_type<tc>, window_params = [{transform_indices = @transform_0, window_bounds = array<i64: 8, 128>}, {pipeline_mode = #tpu.pipeline_mode<synchronous>, transform_indices = @transform_1, window_bounds = array<i64: 16, 128>}, {pipeline_mode = #tpu.pipeline_mode<synchronous>, transform_indices = @transform_2, window_bounds = array<i64: 8, 128>}, {pipeline_mode = #tpu.pipeline_mode<synchronous>, transform_indices = @transform_3, window_bounds = array<i64: 8, 128>}, {transform_indices = @transform_4, window_bounds = array<i64: 8, 128>}]} {
    %c8_i32 = arith.constant 8 : i32
    %0 = arith.muli %arg0, %c8_i32 : i32
    %c0 = arith.constant 0 : index
    %1 = memref.load %arg1[%c0] : memref<8xf32, #tpu.memory_space<smem>>
    %c1 = arith.constant 1 : index
    %2 = memref.load %arg1[%c1] : memref<8xf32, #tpu.memory_space<smem>>
    %c2 = arith.constant 2 : index
    %3 = memref.load %arg1[%c2] : memref<8xf32, #tpu.memory_space<smem>>
    %c3 = arith.constant 3 : index
    %4 = memref.load %arg1[%c3] : memref<8xf32, #tpu.memory_space<smem>>
    %c4 = arith.constant 4 : index
    %5 = memref.load %arg1[%c4] : memref<8xf32, #tpu.memory_space<smem>>
    %c5 = arith.constant 5 : index
    %6 = memref.load %arg1[%c5] : memref<8xf32, #tpu.memory_space<smem>>
    %c6 = arith.constant 6 : index
    %7 = memref.load %arg1[%c6] : memref<8xf32, #tpu.memory_space<smem>>
    %c7 = arith.constant 7 : index
    %8 = memref.load %arg1[%c7] : memref<8xf32, #tpu.memory_space<smem>>
    %c0_0 = arith.constant 0 : index
    %c0_1 = arith.constant 0 : index
    %9 = vector.load %arg6[%c0_0, %c0_1] : memref<16x128xf32, #tpu.memory_space<vmem>>, vector<16x128xf32>
    %c0_2 = arith.constant 0 : index
    %c0_3 = arith.constant 0 : index
    %10 = vector.load %arg7[%c0_2, %c0_3] : memref<8x128xf32, #tpu.memory_space<vmem>>, vector<8x128xf32>
    %c0_4 = arith.constant 0 : index
    %c0_5 = arith.constant 0 : index
    %11 = vector.load %arg8[%c0_4, %c0_5] : memref<8x128xf32, #tpu.memory_space<vmem>>, vector<8x128xf32>
    %12 = tpu.iota {dimensions = array<i32: 0>} : vector<16x1xi32>
    %13 = tpu.iota {dimensions = array<i32: 0>} : vector<8x1xi32>
    %14 = tpu.iota {dimensions = array<i32: 0>} : vector<8x1xi32>
    %c0_i32 = arith.constant 0 : i32
    %15 = arith.addi %0, %c0_i32 : i32
    %c6_i32 = arith.constant 6 : i32
    %16 = arith.muli %15, %c6_i32 : i32
    %false = arith.constant false
    %17 = vector.broadcast %false : i1 to vector<16x1xi1>
    %c0_i32_6 = arith.constant 0 : i32
    %18 = arith.addi %16, %c0_i32_6 : i32
    %19 = arith.index_cast %18 : i32 to index
    %20 = memref.load %arg2[%19] : memref<96xi32, #tpu.memory_space<smem>>
    %21 = vector.broadcast %20 : i32 to vector<16x1xi32>
    %22 = arith.cmpi eq, %12, %21 : vector<16x1xi32>
    %23 = arith.ori %17, %22 : vector<16x1xi1>
    %c1_i32 = arith.constant 1 : i32
    %24 = arith.addi %16, %c1_i32 : i32
    %25 = arith.index_cast %24 : i32 to index
    %26 = memref.load %arg2[%25] : memref<96xi32, #tpu.memory_space<smem>>
    %27 = vector.broadcast %26 : i32 to vector<16x1xi32>
    %28 = arith.cmpi eq, %12, %27 : vector<16x1xi32>
    %29 = arith.ori %23, %28 : vector<16x1xi1>
    %c2_i32 = arith.constant 2 : i32
    %30 = arith.addi %16, %c2_i32 : i32
    %31 = arith.index_cast %30 : i32 to index
    %32 = memref.load %arg2[%31] : memref<96xi32, #tpu.memory_space<smem>>
    %33 = vector.broadcast %32 : i32 to vector<16x1xi32>
    %34 = arith.cmpi eq, %12, %33 : vector<16x1xi32>
    %35 = arith.ori %29, %34 : vector<16x1xi1>
    %c3_i32 = arith.constant 3 : i32
    %36 = arith.addi %16, %c3_i32 : i32
    %37 = arith.index_cast %36 : i32 to index
    %38 = memref.load %arg2[%37] : memref<96xi32, #tpu.memory_space<smem>>
    %39 = vector.broadcast %38 : i32 to vector<16x1xi32>
    %40 = arith.cmpi eq, %12, %39 : vector<16x1xi32>
    %41 = arith.ori %35, %40 : vector<16x1xi1>
    %c4_i32 = arith.constant 4 : i32
    %42 = arith.addi %16, %c4_i32 : i32
    %43 = arith.index_cast %42 : i32 to index
    %44 = memref.load %arg2[%43] : memref<96xi32, #tpu.memory_space<smem>>
    %45 = vector.broadcast %44 : i32 to vector<16x1xi32>
    %46 = arith.cmpi eq, %12, %45 : vector<16x1xi32>
    %47 = arith.ori %41, %46 : vector<16x1xi1>
    %c5_i32 = arith.constant 5 : i32
    %48 = arith.addi %16, %c5_i32 : i32
    %49 = arith.index_cast %48 : i32 to index
    %50 = memref.load %arg2[%49] : memref<96xi32, #tpu.memory_space<smem>>
    %51 = vector.broadcast %50 : i32 to vector<16x1xi32>
    %52 = arith.cmpi eq, %12, %51 : vector<16x1xi32>
    %53 = arith.ori %47, %52 : vector<16x1xi1>
    %cst = arith.constant 0.000000e+00 : f32
    %54 = vector.shape_cast %53 : vector<16x1xi1> to vector<16x1xi1>
    %55 = vector.broadcast %54 : vector<16x1xi1> to vector<16x128xi1>
    %56 = vector.broadcast %cst : f32 to vector<16x128xf32>
    %57 = arith.select %55, %9, %56 : vector<16x128xi1>, vector<16x128xf32>
    %cst_7 = arith.constant dense<0xFF800000> : vector<128xf32>
    %58 = vector.multi_reduction <maximumf>, %57, %cst_7 [0] : vector<16x128xf32> to vector<128xf32>
    %59 = vector.shape_cast %58 : vector<128xf32> to vector<1x128xf32>
    %c4_i32_8 = arith.constant 4 : i32
    %60 = arith.muli %15, %c4_i32_8 : i32
    %false_9 = arith.constant false
    %61 = vector.broadcast %false_9 : i1 to vector<8x1xi1>
    %c0_i32_10 = arith.constant 0 : i32
    %62 = arith.addi %60, %c0_i32_10 : i32
    %63 = arith.index_cast %62 : i32 to index
    %64 = memref.load %arg3[%63] : memref<64xi32, #tpu.memory_space<smem>>
    %65 = vector.broadcast %64 : i32 to vector<8x1xi32>
    %66 = arith.cmpi eq, %13, %65 : vector<8x1xi32>
    %67 = arith.ori %61, %66 : vector<8x1xi1>
    %c1_i32_11 = arith.constant 1 : i32
    %68 = arith.addi %60, %c1_i32_11 : i32
    %69 = arith.index_cast %68 : i32 to index
    %70 = memref.load %arg3[%69] : memref<64xi32, #tpu.memory_space<smem>>
    %71 = vector.broadcast %70 : i32 to vector<8x1xi32>
    %72 = arith.cmpi eq, %13, %71 : vector<8x1xi32>
    %73 = arith.ori %67, %72 : vector<8x1xi1>
    %c2_i32_12 = arith.constant 2 : i32
    %74 = arith.addi %60, %c2_i32_12 : i32
    %75 = arith.index_cast %74 : i32 to index
    %76 = memref.load %arg3[%75] : memref<64xi32, #tpu.memory_space<smem>>
    %77 = vector.broadcast %76 : i32 to vector<8x1xi32>
    %78 = arith.cmpi eq, %13, %77 : vector<8x1xi32>
    %79 = arith.ori %73, %78 : vector<8x1xi1>
    %c3_i32_13 = arith.constant 3 : i32
    %80 = arith.addi %60, %c3_i32_13 : i32
    %81 = arith.index_cast %80 : i32 to index
    %82 = memref.load %arg3[%81] : memref<64xi32, #tpu.memory_space<smem>>
    %83 = vector.broadcast %82 : i32 to vector<8x1xi32>
    %84 = arith.cmpi eq, %13, %83 : vector<8x1xi32>
    %85 = arith.ori %79, %84 : vector<8x1xi1>
    %cst_14 = arith.constant 0.000000e+00 : f32
    %86 = vector.shape_cast %85 : vector<8x1xi1> to vector<8x1xi1>
    %87 = vector.broadcast %86 : vector<8x1xi1> to vector<8x128xi1>
    %88 = vector.broadcast %cst_14 : f32 to vector<8x128xf32>
    %89 = arith.select %87, %10, %88 : vector<8x128xi1>, vector<8x128xf32>
    %cst_15 = arith.constant dense<0xFF800000> : vector<128xf32>
    %90 = vector.multi_reduction <maximumf>, %89, %cst_15 [0] : vector<8x128xf32> to vector<128xf32>
    %91 = vector.shape_cast %90 : vector<128xf32> to vector<1x128xf32>
    %c4_i32_16 = arith.constant 4 : i32
    %92 = arith.muli %15, %c4_i32_16 : i32
    %false_17 = arith.constant false
    %93 = vector.broadcast %false_17 : i1 to vector<8x1xi1>
    %c0_i32_18 = arith.constant 0 : i32
    %94 = arith.addi %92, %c0_i32_18 : i32
    %95 = arith.index_cast %94 : i32 to index
    %96 = memref.load %arg4[%95] : memref<64xi32, #tpu.memory_space<smem>>
    %97 = vector.broadcast %96 : i32 to vector<8x1xi32>
    %98 = arith.cmpi eq, %14, %97 : vector<8x1xi32>
    %99 = arith.ori %93, %98 : vector<8x1xi1>
    %c1_i32_19 = arith.constant 1 : i32
    %100 = arith.addi %92, %c1_i32_19 : i32
    %101 = arith.index_cast %100 : i32 to index
    %102 = memref.load %arg4[%101] : memref<64xi32, #tpu.memory_space<smem>>
    %103 = vector.broadcast %102 : i32 to vector<8x1xi32>
    %104 = arith.cmpi eq, %14, %103 : vector<8x1xi32>
    %105 = arith.ori %99, %104 : vector<8x1xi1>
    %c2_i32_20 = arith.constant 2 : i32
    %106 = arith.addi %92, %c2_i32_20 : i32
    %107 = arith.index_cast %106 : i32 to index
    %108 = memref.load %arg4[%107] : memref<64xi32, #tpu.memory_space<smem>>
    %109 = vector.broadcast %108 : i32 to vector<8x1xi32>
    %110 = arith.cmpi eq, %14, %109 : vector<8x1xi32>
    %111 = arith.ori %105, %110 : vector<8x1xi1>
    %c3_i32_21 = arith.constant 3 : i32
    %112 = arith.addi %92, %c3_i32_21 : i32
    %113 = arith.index_cast %112 : i32 to index
    %114 = memref.load %arg4[%113] : memref<64xi32, #tpu.memory_space<smem>>
    %115 = vector.broadcast %114 : i32 to vector<8x1xi32>
    %116 = arith.cmpi eq, %14, %115 : vector<8x1xi32>
    %117 = arith.ori %111, %116 : vector<8x1xi1>
    %cst_22 = arith.constant 0.000000e+00 : f32
    %118 = vector.shape_cast %117 : vector<8x1xi1> to vector<8x1xi1>
    %119 = vector.broadcast %118 : vector<8x1xi1> to vector<8x128xi1>
    %120 = vector.broadcast %cst_22 : f32 to vector<8x128xf32>
    %121 = arith.select %119, %11, %120 : vector<8x128xi1>, vector<8x128xf32>
    %cst_23 = arith.constant dense<0xFF800000> : vector<128xf32>
    %122 = vector.multi_reduction <maximumf>, %121, %cst_23 [0] : vector<8x128xf32> to vector<128xf32>
    %123 = vector.shape_cast %122 : vector<128xf32> to vector<1x128xf32>
    %124 = vector.broadcast %1 : f32 to vector<1x128xf32>
    %125 = arith.cmpf olt, %59, %124 : vector<1x128xf32>
    %126 = vector.broadcast %2 : f32 to vector<1x128xf32>
    %127 = arith.cmpf olt, %91, %126 : vector<1x128xf32>
    %128 = arith.andi %125, %127 : vector<1x128xi1>
    %129 = vector.broadcast %3 : f32 to vector<1x128xf32>
    %130 = arith.cmpf olt, %123, %129 : vector<1x128xf32>
    %131 = arith.andi %128, %130 : vector<1x128xi1>
    %132 = vector.broadcast %4 : f32 to vector<1x128xf32>
    %133 = arith.cmpf ogt, %59, %132 : vector<1x128xf32>
    %134 = vector.broadcast %5 : f32 to vector<1x128xf32>
    %135 = arith.cmpf ogt, %91, %134 : vector<1x128xf32>
    %136 = arith.ori %133, %135 : vector<1x128xi1>
    %137 = vector.broadcast %6 : f32 to vector<1x128xf32>
    %138 = arith.cmpf ogt, %123, %137 : vector<1x128xf32>
    %139 = arith.ori %136, %138 : vector<1x128xi1>
    %cst_24 = arith.constant 0.000000e+00 : f32
    %140 = vector.broadcast %8 : f32 to vector<1x128xf32>
    %141 = vector.broadcast %cst_24 : f32 to vector<1x128xf32>
    %142 = arith.select %139, %140, %141 : vector<1x128xi1>, vector<1x128xf32>
    %143 = vector.broadcast %7 : f32 to vector<1x128xf32>
    %144 = arith.select %131, %143, %142 : vector<1x128xi1>, vector<1x128xf32>
    %c0_25 = arith.constant 0 : index
    %c0_26 = arith.constant 0 : index
    %145 = vector.load %arg10[%c0_25, %c0_26] : memref<8x128xf32, #tpu.memory_space<vmem>>, vector<1x128xf32>
    tpu.vector_store %arg10[%c0_25, %c0_26], %144 {strides = array<i32>} : memref<8x128xf32, #tpu.memory_space<vmem>>, vector<1x128xf32>,
    %c1_i32_27 = arith.constant 1 : i32
    %146 = arith.addi %0, %c1_i32_27 : i32
    %c6_i32_28 = arith.constant 6 : i32
    %147 = arith.muli %146, %c6_i32_28 : i32
    %false_29 = arith.constant false
    %148 = vector.broadcast %false_29 : i1 to vector<16x1xi1>
    %c0_i32_30 = arith.constant 0 : i32
    %149 = arith.addi %147, %c0_i32_30 : i32
    %150 = arith.index_cast %149 : i32 to index
    %151 = memref.load %arg2[%150] : memref<96xi32, #tpu.memory_space<smem>>
    %152 = vector.broadcast %151 : i32 to vector<16x1xi32>
    %153 = arith.cmpi eq, %12, %152 : vector<16x1xi32>
    %154 = arith.ori %148, %153 : vector<16x1xi1>
    %c1_i32_31 = arith.constant 1 : i32
    %155 = arith.addi %147, %c1_i32_31 : i32
    %156 = arith.index_cast %155 : i32 to index
    %157 = memref.load %arg2[%156] : memref<96xi32, #tpu.memory_space<smem>>
    %158 = vector.broadcast %157 : i32 to vector<16x1xi32>
    %159 = arith.cmpi eq, %12, %158 : vector<16x1xi32>
    %160 = arith.ori %154, %159 : vector<16x1xi1>
    %c2_i32_32 = arith.constant 2 : i32
    %161 = arith.addi %147, %c2_i32_32 : i32
    %162 = arith.index_cast %161 : i32 to index
    %163 = memref.load %arg2[%162] : memref<96xi32, #tpu.memory_space<smem>>
    %164 = vector.broadcast %163 : i32 to vector<16x1xi32>
    %165 = arith.cmpi eq, %12, %164 : vector<16x1xi32>
    %166 = arith.ori %160, %165 : vector<16x1xi1>
    %c3_i32_33 = arith.constant 3 : i32
    %167 = arith.addi %147, %c3_i32_33 : i32
    %168 = arith.index_cast %167 : i32 to index
    %169 = memref.load %arg2[%168] : memref<96xi32, #tpu.memory_space<smem>>
    %170 = vector.broadcast %169 : i32 to vector<16x1xi32>
    %171 = arith.cmpi eq, %12, %170 : vector<16x1xi32>
    %172 = arith.ori %166, %171 : vector<16x1xi1>
    %c4_i32_34 = arith.constant 4 : i32
    %173 = arith.addi %147, %c4_i32_34 : i32
    %174 = arith.index_cast %173 : i32 to index
    %175 = memref.load %arg2[%174] : memref<96xi32, #tpu.memory_space<smem>>
    %176 = vector.broadcast %175 : i32 to vector<16x1xi32>
    %177 = arith.cmpi eq, %12, %176 : vector<16x1xi32>
    %178 = arith.ori %172, %177 : vector<16x1xi1>
    %c5_i32_35 = arith.constant 5 : i32
    %179 = arith.addi %147, %c5_i32_35 : i32
    %180 = arith.index_cast %179 : i32 to index
    %181 = memref.load %arg2[%180] : memref<96xi32, #tpu.memory_space<smem>>
    %182 = vector.broadcast %181 : i32 to vector<16x1xi32>
    %183 = arith.cmpi eq, %12, %182 : vector<16x1xi32>
    %184 = arith.ori %178, %183 : vector<16x1xi1>
    %cst_36 = arith.constant 0.000000e+00 : f32
    %185 = vector.shape_cast %184 : vector<16x1xi1> to vector<16x1xi1>
    %186 = vector.broadcast %185 : vector<16x1xi1> to vector<16x128xi1>
    %187 = vector.broadcast %cst_36 : f32 to vector<16x128xf32>
    %188 = arith.select %186, %9, %187 : vector<16x128xi1>, vector<16x128xf32>
    %cst_37 = arith.constant dense<0xFF800000> : vector<128xf32>
    %189 = vector.multi_reduction <maximumf>, %188, %cst_37 [0] : vector<16x128xf32> to vector<128xf32>
    %190 = vector.shape_cast %189 : vector<128xf32> to vector<1x128xf32>
    %c4_i32_38 = arith.constant 4 : i32
    %191 = arith.muli %146, %c4_i32_38 : i32
    %false_39 = arith.constant false
    %192 = vector.broadcast %false_39 : i1 to vector<8x1xi1>
    %c0_i32_40 = arith.constant 0 : i32
    %193 = arith.addi %191, %c0_i32_40 : i32
    %194 = arith.index_cast %193 : i32 to index
    %195 = memref.load %arg3[%194] : memref<64xi32, #tpu.memory_space<smem>>
    %196 = vector.broadcast %195 : i32 to vector<8x1xi32>
    %197 = arith.cmpi eq, %13, %196 : vector<8x1xi32>
    %198 = arith.ori %192, %197 : vector<8x1xi1>
    %c1_i32_41 = arith.constant 1 : i32
    %199 = arith.addi %191, %c1_i32_41 : i32
    %200 = arith.index_cast %199 : i32 to index
    %201 = memref.load %arg3[%200] : memref<64xi32, #tpu.memory_space<smem>>
    %202 = vector.broadcast %201 : i32 to vector<8x1xi32>
    %203 = arith.cmpi eq, %13, %202 : vector<8x1xi32>
    %204 = arith.ori %198, %203 : vector<8x1xi1>
    %c2_i32_42 = arith.constant 2 : i32
    %205 = arith.addi %191, %c2_i32_42 : i32
    %206 = arith.index_cast %205 : i32 to index
    %207 = memref.load %arg3[%206] : memref<64xi32, #tpu.memory_space<smem>>
    %208 = vector.broadcast %207 : i32 to vector<8x1xi32>
    %209 = arith.cmpi eq, %13, %208 : vector<8x1xi32>
    %210 = arith.ori %204, %209 : vector<8x1xi1>
    %c3_i32_43 = arith.constant 3 : i32
    %211 = arith.addi %191, %c3_i32_43 : i32
    %212 = arith.index_cast %211 : i32 to index
    %213 = memref.load %arg3[%212] : memref<64xi32, #tpu.memory_space<smem>>
    %214 = vector.broadcast %213 : i32 to vector<8x1xi32>
    %215 = arith.cmpi eq, %13, %214 : vector<8x1xi32>
    %216 = arith.ori %210, %215 : vector<8x1xi1>
    %cst_44 = arith.constant 0.000000e+00 : f32
    %217 = vector.shape_cast %216 : vector<8x1xi1> to vector<8x1xi1>
    %218 = vector.broadcast %217 : vector<8x1xi1> to vector<8x128xi1>
    %219 = vector.broadcast %cst_44 : f32 to vector<8x128xf32>
    %220 = arith.select %218, %10, %219 : vector<8x128xi1>, vector<8x128xf32>
    %cst_45 = arith.constant dense<0xFF800000> : vector<128xf32>
    %221 = vector.multi_reduction <maximumf>, %220, %cst_45 [0] : vector<8x128xf32> to vector<128xf32>
    %222 = vector.shape_cast %221 : vector<128xf32> to vector<1x128xf32>
    %c4_i32_46 = arith.constant 4 : i32
    %223 = arith.muli %146, %c4_i32_46 : i32
    %false_47 = arith.constant false
    %224 = vector.broadcast %false_47 : i1 to vector<8x1xi1>
    %c0_i32_48 = arith.constant 0 : i32
    %225 = arith.addi %223, %c0_i32_48 : i32
    %226 = arith.index_cast %225 : i32 to index
    %227 = memref.load %arg4[%226] : memref<64xi32, #tpu.memory_space<smem>>
    %228 = vector.broadcast %227 : i32 to vector<8x1xi32>
    %229 = arith.cmpi eq, %14, %228 : vector<8x1xi32>
    %230 = arith.ori %224, %229 : vector<8x1xi1>
    %c1_i32_49 = arith.constant 1 : i32
    %231 = arith.addi %223, %c1_i32_49 : i32
    %232 = arith.index_cast %231 : i32 to index
    %233 = memref.load %arg4[%232] : memref<64xi32, #tpu.memory_space<smem>>
    %234 = vector.broadcast %233 : i32 to vector<8x1xi32>
    %235 = arith.cmpi eq, %14, %234 : vector<8x1xi32>
    %236 = arith.ori %230, %235 : vector<8x1xi1>
    %c2_i32_50 = arith.constant 2 : i32
    %237 = arith.addi %223, %c2_i32_50 : i32
    %238 = arith.index_cast %237 : i32 to index
    %239 = memref.load %arg4[%238] : memref<64xi32, #tpu.memory_space<smem>>
    %240 = vector.broadcast %239 : i32 to vector<8x1xi32>
    %241 = arith.cmpi eq, %14, %240 : vector<8x1xi32>
    %242 = arith.ori %236, %241 : vector<8x1xi1>
    %c3_i32_51 = arith.constant 3 : i32
    %243 = arith.addi %223, %c3_i32_51 : i32
    %244 = arith.index_cast %243 : i32 to index
    %245 = memref.load %arg4[%244] : memref<64xi32, #tpu.memory_space<smem>>
    %246 = vector.broadcast %245 : i32 to vector<8x1xi32>
    %247 = arith.cmpi eq, %14, %246 : vector<8x1xi32>
    %248 = arith.ori %242, %247 : vector<8x1xi1>
    %cst_52 = arith.constant 0.000000e+00 : f32
    %249 = vector.shape_cast %248 : vector<8x1xi1> to vector<8x1xi1>
    %250 = vector.broadcast %249 : vector<8x1xi1> to vector<8x128xi1>
    %251 = vector.broadcast %cst_52 : f32 to vector<8x128xf32>
    %252 = arith.select %250, %11, %251 : vector<8x128xi1>, vector<8x128xf32>
    %cst_53 = arith.constant dense<0xFF800000> : vector<128xf32>
    %253 = vector.multi_reduction <maximumf>, %252, %cst_53 [0] : vector<8x128xf32> to vector<128xf32>
    %254 = vector.shape_cast %253 : vector<128xf32> to vector<1x128xf32>
    %255 = vector.broadcast %1 : f32 to vector<1x128xf32>
    %256 = arith.cmpf olt, %190, %255 : vector<1x128xf32>
    %257 = vector.broadcast %2 : f32 to vector<1x128xf32>
    %258 = arith.cmpf olt, %222, %257 : vector<1x128xf32>
    %259 = arith.andi %256, %258 : vector<1x128xi1>
    %260 = vector.broadcast %3 : f32 to vector<1x128xf32>
    %261 = arith.cmpf olt, %254, %260 : vector<1x128xf32>
    %262 = arith.andi %259, %261 : vector<1x128xi1>
    %263 = vector.broadcast %4 : f32 to vector<1x128xf32>
    %264 = arith.cmpf ogt, %190, %263 : vector<1x128xf32>
    %265 = vector.broadcast %5 : f32 to vector<1x128xf32>
    %266 = arith.cmpf ogt, %222, %265 : vector<1x128xf32>
    %267 = arith.ori %264, %266 : vector<1x128xi1>
    %268 = vector.broadcast %6 : f32 to vector<1x128xf32>
    %269 = arith.cmpf ogt, %254, %268 : vector<1x128xf32>
    %270 = arith.ori %267, %269 : vector<1x128xi1>
    %cst_54 = arith.constant 0.000000e+00 : f32
    %271 = vector.broadcast %8 : f32 to vector<1x128xf32>
    %272 = vector.broadcast %cst_54 : f32 to vector<1x128xf32>
    %273 = arith.select %270, %271, %272 : vector<1x128xi1>, vector<1x128xf32>
    %274 = vector.broadcast %7 : f32 to vector<1x128xf32>
    %275 = arith.select %262, %274, %273 : vector<1x128xi1>, vector<1x128xf32>
    %c1_55 = arith.constant 1 : index
    %c0_56 = arith.constant 0 : index
    %276 = vector.load %arg10[%c1_55, %c0_56] : memref<8x128xf32, #tpu.memory_space<vmem>>, vector<1x128xf32>
    tpu.vector_store %arg10[%c1_55, %c0_56], %275 {strides = array<i32>} : memref<8x128xf32, #tpu.memory_space<vmem>>, vector<1x128xf32>,
    %c2_i32_57 = arith.constant 2 : i32
    %277 = arith.addi %0, %c2_i32_57 : i32
    %c6_i32_58 = arith.constant 6 : i32
    %278 = arith.muli %277, %c6_i32_58 : i32
    %false_59 = arith.constant false
    %279 = vector.broadcast %false_59 : i1 to vector<16x1xi1>
    %c0_i32_60 = arith.constant 0 : i32
    %280 = arith.addi %278, %c0_i32_60 : i32
    %281 = arith.index_cast %280 : i32 to index
    %282 = memref.load %arg2[%281] : memref<96xi32, #tpu.memory_space<smem>>
    %283 = vector.broadcast %282 : i32 to vector<16x1xi32>
    %284 = arith.cmpi eq, %12, %283 : vector<16x1xi32>
    %285 = arith.ori %279, %284 : vector<16x1xi1>
    %c1_i32_61 = arith.constant 1 : i32
    %286 = arith.addi %278, %c1_i32_61 : i32
    %287 = arith.index_cast %286 : i32 to index
    %288 = memref.load %arg2[%287] : memref<96xi32, #tpu.memory_space<smem>>
    %289 = vector.broadcast %288 : i32 to vector<16x1xi32>
    %290 = arith.cmpi eq, %12, %289 : vector<16x1xi32>
    %291 = arith.ori %285, %290 : vector<16x1xi1>
    %c2_i32_62 = arith.constant 2 : i32
    %292 = arith.addi %278, %c2_i32_62 : i32
    %293 = arith.index_cast %292 : i32 to index
    %294 = memref.load %arg2[%293] : memref<96xi32, #tpu.memory_space<smem>>
    %295 = vector.broadcast %294 : i32 to vector<16x1xi32>
    %296 = arith.cmpi eq, %12, %295 : vector<16x1xi32>
    %297 = arith.ori %291, %296 : vector<16x1xi1>
    %c3_i32_63 = arith.constant 3 : i32
    %298 = arith.addi %278, %c3_i32_63 : i32
    %299 = arith.index_cast %298 : i32 to index
    %300 = memref.load %arg2[%299] : memref<96xi32, #tpu.memory_space<smem>>
    %301 = vector.broadcast %300 : i32 to vector<16x1xi32>
    %302 = arith.cmpi eq, %12, %301 : vector<16x1xi32>
    %303 = arith.ori %297, %302 : vector<16x1xi1>
    %c4_i32_64 = arith.constant 4 : i32
    %304 = arith.addi %278, %c4_i32_64 : i32
    %305 = arith.index_cast %304 : i32 to index
    %306 = memref.load %arg2[%305] : memref<96xi32, #tpu.memory_space<smem>>
    %307 = vector.broadcast %306 : i32 to vector<16x1xi32>
    %308 = arith.cmpi eq, %12, %307 : vector<16x1xi32>
    %309 = arith.ori %303, %308 : vector<16x1xi1>
    %c5_i32_65 = arith.constant 5 : i32
    %310 = arith.addi %278, %c5_i32_65 : i32
    %311 = arith.index_cast %310 : i32 to index
    %312 = memref.load %arg2[%311] : memref<96xi32, #tpu.memory_space<smem>>
    %313 = vector.broadcast %312 : i32 to vector<16x1xi32>
    %314 = arith.cmpi eq, %12, %313 : vector<16x1xi32>
    %315 = arith.ori %309, %314 : vector<16x1xi1>
    %cst_66 = arith.constant 0.000000e+00 : f32
    %316 = vector.shape_cast %315 : vector<16x1xi1> to vector<16x1xi1>
    %317 = vector.broadcast %316 : vector<16x1xi1> to vector<16x128xi1>
    %318 = vector.broadcast %cst_66 : f32 to vector<16x128xf32>
    %319 = arith.select %317, %9, %318 : vector<16x128xi1>, vector<16x128xf32>
    %cst_67 = arith.constant dense<0xFF800000> : vector<128xf32>
    %320 = vector.multi_reduction <maximumf>, %319, %cst_67 [0] : vector<16x128xf32> to vector<128xf32>
    %321 = vector.shape_cast %320 : vector<128xf32> to vector<1x128xf32>
    %c4_i32_68 = arith.constant 4 : i32
    %322 = arith.muli %277, %c4_i32_68 : i32
    %false_69 = arith.constant false
    %323 = vector.broadcast %false_69 : i1 to vector<8x1xi1>
    %c0_i32_70 = arith.constant 0 : i32
    %324 = arith.addi %322, %c0_i32_70 : i32
    %325 = arith.index_cast %324 : i32 to index
    %326 = memref.load %arg3[%325] : memref<64xi32, #tpu.memory_space<smem>>
    %327 = vector.broadcast %326 : i32 to vector<8x1xi32>
    %328 = arith.cmpi eq, %13, %327 : vector<8x1xi32>
    %329 = arith.ori %323, %328 : vector<8x1xi1>
    %c1_i32_71 = arith.constant 1 : i32
    %330 = arith.addi %322, %c1_i32_71 : i32
    %331 = arith.index_cast %330 : i32 to index
    %332 = memref.load %arg3[%331] : memref<64xi32, #tpu.memory_space<smem>>
    %333 = vector.broadcast %332 : i32 to vector<8x1xi32>
    %334 = arith.cmpi eq, %13, %333 : vector<8x1xi32>
    %335 = arith.ori %329, %334 : vector<8x1xi1>
    %c2_i32_72 = arith.constant 2 : i32
    %336 = arith.addi %322, %c2_i32_72 : i32
    %337 = arith.index_cast %336 : i32 to index
    %338 = memref.load %arg3[%337] : memref<64xi32, #tpu.memory_space<smem>>
    %339 = vector.broadcast %338 : i32 to vector<8x1xi32>
    %340 = arith.cmpi eq, %13, %339 : vector<8x1xi32>
    %341 = arith.ori %335, %340 : vector<8x1xi1>
    %c3_i32_73 = arith.constant 3 : i32
    %342 = arith.addi %322, %c3_i32_73 : i32
    %343 = arith.index_cast %342 : i32 to index
    %344 = memref.load %arg3[%343] : memref<64xi32, #tpu.memory_space<smem>>
    %345 = vector.broadcast %344 : i32 to vector<8x1xi32>
    %346 = arith.cmpi eq, %13, %345 : vector<8x1xi32>
    %347 = arith.ori %341, %346 : vector<8x1xi1>
    %cst_74 = arith.constant 0.000000e+00 : f32
    %348 = vector.shape_cast %347 : vector<8x1xi1> to vector<8x1xi1>
    %349 = vector.broadcast %348 : vector<8x1xi1> to vector<8x128xi1>
    %350 = vector.broadcast %cst_74 : f32 to vector<8x128xf32>
    %351 = arith.select %349, %10, %350 : vector<8x128xi1>, vector<8x128xf32>
    %cst_75 = arith.constant dense<0xFF800000> : vector<128xf32>
    %352 = vector.multi_reduction <maximumf>, %351, %cst_75 [0] : vector<8x128xf32> to vector<128xf32>
    %353 = vector.shape_cast %352 : vector<128xf32> to vector<1x128xf32>
    %c4_i32_76 = arith.constant 4 : i32
    %354 = arith.muli %277, %c4_i32_76 : i32
    %false_77 = arith.constant false
    %355 = vector.broadcast %false_77 : i1 to vector<8x1xi1>
    %c0_i32_78 = arith.constant 0 : i32
    %356 = arith.addi %354, %c0_i32_78 : i32
    %357 = arith.index_cast %356 : i32 to index
    %358 = memref.load %arg4[%357] : memref<64xi32, #tpu.memory_space<smem>>
    %359 = vector.broadcast %358 : i32 to vector<8x1xi32>
    %360 = arith.cmpi eq, %14, %359 : vector<8x1xi32>
    %361 = arith.ori %355, %360 : vector<8x1xi1>
    %c1_i32_79 = arith.constant 1 : i32
    %362 = arith.addi %354, %c1_i32_79 : i32
    %363 = arith.index_cast %362 : i32 to index
    %364 = memref.load %arg4[%363] : memref<64xi32, #tpu.memory_space<smem>>
    %365 = vector.broadcast %364 : i32 to vector<8x1xi32>
    %366 = arith.cmpi eq, %14, %365 : vector<8x1xi32>
    %367 = arith.ori %361, %366 : vector<8x1xi1>
    %c2_i32_80 = arith.constant 2 : i32
    %368 = arith.addi %354, %c2_i32_80 : i32
    %369 = arith.index_cast %368 : i32 to index
    %370 = memref.load %arg4[%369] : memref<64xi32, #tpu.memory_space<smem>>
    %371 = vector.broadcast %370 : i32 to vector<8x1xi32>
    %372 = arith.cmpi eq, %14, %371 : vector<8x1xi32>
    %373 = arith.ori %367, %372 : vector<8x1xi1>
    %c3_i32_81 = arith.constant 3 : i32
    %374 = arith.addi %354, %c3_i32_81 : i32
    %375 = arith.index_cast %374 : i32 to index
    %376 = memref.load %arg4[%375] : memref<64xi32, #tpu.memory_space<smem>>
    %377 = vector.broadcast %376 : i32 to vector<8x1xi32>
    %378 = arith.cmpi eq, %14, %377 : vector<8x1xi32>
    %379 = arith.ori %373, %378 : vector<8x1xi1>
    %cst_82 = arith.constant 0.000000e+00 : f32
    %380 = vector.shape_cast %379 : vector<8x1xi1> to vector<8x1xi1>
    %381 = vector.broadcast %380 : vector<8x1xi1> to vector<8x128xi1>
    %382 = vector.broadcast %cst_82 : f32 to vector<8x128xf32>
    %383 = arith.select %381, %11, %382 : vector<8x128xi1>, vector<8x128xf32>
    %cst_83 = arith.constant dense<0xFF800000> : vector<128xf32>
    %384 = vector.multi_reduction <maximumf>, %383, %cst_83 [0] : vector<8x128xf32> to vector<128xf32>
    %385 = vector.shape_cast %384 : vector<128xf32> to vector<1x128xf32>
    %386 = vector.broadcast %1 : f32 to vector<1x128xf32>
    %387 = arith.cmpf olt, %321, %386 : vector<1x128xf32>
    %388 = vector.broadcast %2 : f32 to vector<1x128xf32>
    %389 = arith.cmpf olt, %353, %388 : vector<1x128xf32>
    %390 = arith.andi %387, %389 : vector<1x128xi1>
    %391 = vector.broadcast %3 : f32 to vector<1x128xf32>
    %392 = arith.cmpf olt, %385, %391 : vector<1x128xf32>
    %393 = arith.andi %390, %392 : vector<1x128xi1>
    %394 = vector.broadcast %4 : f32 to vector<1x128xf32>
    %395 = arith.cmpf ogt, %321, %394 : vector<1x128xf32>
    %396 = vector.broadcast %5 : f32 to vector<1x128xf32>
    %397 = arith.cmpf ogt, %353, %396 : vector<1x128xf32>
    %398 = arith.ori %395, %397 : vector<1x128xi1>
    %399 = vector.broadcast %6 : f32 to vector<1x128xf32>
    %400 = arith.cmpf ogt, %385, %399 : vector<1x128xf32>
    %401 = arith.ori %398, %400 : vector<1x128xi1>
    %cst_84 = arith.constant 0.000000e+00 : f32
    %402 = vector.broadcast %8 : f32 to vector<1x128xf32>
    %403 = vector.broadcast %cst_84 : f32 to vector<1x128xf32>
    %404 = arith.select %401, %402, %403 : vector<1x128xi1>, vector<1x128xf32>
    %405 = vector.broadcast %7 : f32 to vector<1x128xf32>
    %406 = arith.select %393, %405, %404 : vector<1x128xi1>, vector<1x128xf32>
    %c2_85 = arith.constant 2 : index
    %c0_86 = arith.constant 0 : index
    %407 = vector.load %arg10[%c2_85, %c0_86] : memref<8x128xf32, #tpu.memory_space<vmem>>, vector<1x128xf32>
    tpu.vector_store %arg10[%c2_85, %c0_86], %406 {strides = array<i32>} : memref<8x128xf32, #tpu.memory_space<vmem>>, vector<1x128xf32>,
    %c3_i32_87 = arith.constant 3 : i32
    %408 = arith.addi %0, %c3_i32_87 : i32
    %c6_i32_88 = arith.constant 6 : i32
    %409 = arith.muli %408, %c6_i32_88 : i32
    %false_89 = arith.constant false
    %410 = vector.broadcast %false_89 : i1 to vector<16x1xi1>
    %c0_i32_90 = arith.constant 0 : i32
    %411 = arith.addi %409, %c0_i32_90 : i32
    %412 = arith.index_cast %411 : i32 to index
    %413 = memref.load %arg2[%412] : memref<96xi32, #tpu.memory_space<smem>>
    %414 = vector.broadcast %413 : i32 to vector<16x1xi32>
    %415 = arith.cmpi eq, %12, %414 : vector<16x1xi32>
    %416 = arith.ori %410, %415 : vector<16x1xi1>
    %c1_i32_91 = arith.constant 1 : i32
    %417 = arith.addi %409, %c1_i32_91 : i32
    %418 = arith.index_cast %417 : i32 to index
    %419 = memref.load %arg2[%418] : memref<96xi32, #tpu.memory_space<smem>>
    %420 = vector.broadcast %419 : i32 to vector<16x1xi32>
    %421 = arith.cmpi eq, %12, %420 : vector<16x1xi32>
    %422 = arith.ori %416, %421 : vector<16x1xi1>
    %c2_i32_92 = arith.constant 2 : i32
    %423 = arith.addi %409, %c2_i32_92 : i32
    %424 = arith.index_cast %423 : i32 to index
    %425 = memref.load %arg2[%424] : memref<96xi32, #tpu.memory_space<smem>>
    %426 = vector.broadcast %425 : i32 to vector<16x1xi32>
    %427 = arith.cmpi eq, %12, %426 : vector<16x1xi32>
    %428 = arith.ori %422, %427 : vector<16x1xi1>
    %c3_i32_93 = arith.constant 3 : i32
    %429 = arith.addi %409, %c3_i32_93 : i32
    %430 = arith.index_cast %429 : i32 to index
    %431 = memref.load %arg2[%430] : memref<96xi32, #tpu.memory_space<smem>>
    %432 = vector.broadcast %431 : i32 to vector<16x1xi32>
    %433 = arith.cmpi eq, %12, %432 : vector<16x1xi32>
    %434 = arith.ori %428, %433 : vector<16x1xi1>
    %c4_i32_94 = arith.constant 4 : i32
    %435 = arith.addi %409, %c4_i32_94 : i32
    %436 = arith.index_cast %435 : i32 to index
    %437 = memref.load %arg2[%436] : memref<96xi32, #tpu.memory_space<smem>>
    %438 = vector.broadcast %437 : i32 to vector<16x1xi32>
    %439 = arith.cmpi eq, %12, %438 : vector<16x1xi32>
    %440 = arith.ori %434, %439 : vector<16x1xi1>
    %c5_i32_95 = arith.constant 5 : i32
    %441 = arith.addi %409, %c5_i32_95 : i32
    %442 = arith.index_cast %441 : i32 to index
    %443 = memref.load %arg2[%442] : memref<96xi32, #tpu.memory_space<smem>>
    %444 = vector.broadcast %443 : i32 to vector<16x1xi32>
    %445 = arith.cmpi eq, %12, %444 : vector<16x1xi32>
    %446 = arith.ori %440, %445 : vector<16x1xi1>
    %cst_96 = arith.constant 0.000000e+00 : f32
    %447 = vector.shape_cast %446 : vector<16x1xi1> to vector<16x1xi1>
    %448 = vector.broadcast %447 : vector<16x1xi1> to vector<16x128xi1>
    %449 = vector.broadcast %cst_96 : f32 to vector<16x128xf32>
    %450 = arith.select %448, %9, %449 : vector<16x128xi1>, vector<16x128xf32>
    %cst_97 = arith.constant dense<0xFF800000> : vector<128xf32>
    %451 = vector.multi_reduction <maximumf>, %450, %cst_97 [0] : vector<16x128xf32> to vector<128xf32>
    %452 = vector.shape_cast %451 : vector<128xf32> to vector<1x128xf32>
    %c4_i32_98 = arith.constant 4 : i32
    %453 = arith.muli %408, %c4_i32_98 : i32
    %false_99 = arith.constant false
    %454 = vector.broadcast %false_99 : i1 to vector<8x1xi1>
    %c0_i32_100 = arith.constant 0 : i32
    %455 = arith.addi %453, %c0_i32_100 : i32
    %456 = arith.index_cast %455 : i32 to index
    %457 = memref.load %arg3[%456] : memref<64xi32, #tpu.memory_space<smem>>
    %458 = vector.broadcast %457 : i32 to vector<8x1xi32>
    %459 = arith.cmpi eq, %13, %458 : vector<8x1xi32>
    %460 = arith.ori %454, %459 : vector<8x1xi1>
    %c1_i32_101 = arith.constant 1 : i32
    %461 = arith.addi %453, %c1_i32_101 : i32
    %462 = arith.index_cast %461 : i32 to index
    %463 = memref.load %arg3[%462] : memref<64xi32, #tpu.memory_space<smem>>
    %464 = vector.broadcast %463 : i32 to vector<8x1xi32>
    %465 = arith.cmpi eq, %13, %464 : vector<8x1xi32>
    %466 = arith.ori %460, %465 : vector<8x1xi1>
    %c2_i32_102 = arith.constant 2 : i32
    %467 = arith.addi %453, %c2_i32_102 : i32
    %468 = arith.index_cast %467 : i32 to index
    %469 = memref.load %arg3[%468] : memref<64xi32, #tpu.memory_space<smem>>
    %470 = vector.broadcast %469 : i32 to vector<8x1xi32>
    %471 = arith.cmpi eq, %13, %470 : vector<8x1xi32>
    %472 = arith.ori %466, %471 : vector<8x1xi1>
    %c3_i32_103 = arith.constant 3 : i32
    %473 = arith.addi %453, %c3_i32_103 : i32
    %474 = arith.index_cast %473 : i32 to index
    %475 = memref.load %arg3[%474] : memref<64xi32, #tpu.memory_space<smem>>
    %476 = vector.broadcast %475 : i32 to vector<8x1xi32>
    %477 = arith.cmpi eq, %13, %476 : vector<8x1xi32>
    %478 = arith.ori %472, %477 : vector<8x1xi1>
    %cst_104 = arith.constant 0.000000e+00 : f32
    %479 = vector.shape_cast %478 : vector<8x1xi1> to vector<8x1xi1>
    %480 = vector.broadcast %479 : vector<8x1xi1> to vector<8x128xi1>
    %481 = vector.broadcast %cst_104 : f32 to vector<8x128xf32>
    %482 = arith.select %480, %10, %481 : vector<8x128xi1>, vector<8x128xf32>
    %cst_105 = arith.constant dense<0xFF800000> : vector<128xf32>
    %483 = vector.multi_reduction <maximumf>, %482, %cst_105 [0] : vector<8x128xf32> to vector<128xf32>
    %484 = vector.shape_cast %483 : vector<128xf32> to vector<1x128xf32>
    %c4_i32_106 = arith.constant 4 : i32
    %485 = arith.muli %408, %c4_i32_106 : i32
    %false_107 = arith.constant false
    %486 = vector.broadcast %false_107 : i1 to vector<8x1xi1>
    %c0_i32_108 = arith.constant 0 : i32
    %487 = arith.addi %485, %c0_i32_108 : i32
    %488 = arith.index_cast %487 : i32 to index
    %489 = memref.load %arg4[%488] : memref<64xi32, #tpu.memory_space<smem>>
    %490 = vector.broadcast %489 : i32 to vector<8x1xi32>
    %491 = arith.cmpi eq, %14, %490 : vector<8x1xi32>
    %492 = arith.ori %486, %491 : vector<8x1xi1>
    %c1_i32_109 = arith.constant 1 : i32
    %493 = arith.addi %485, %c1_i32_109 : i32
    %494 = arith.index_cast %493 : i32 to index
    %495 = memref.load %arg4[%494] : memref<64xi32, #tpu.memory_space<smem>>
    %496 = vector.broadcast %495 : i32 to vector<8x1xi32>
    %497 = arith.cmpi eq, %14, %496 : vector<8x1xi32>
    %498 = arith.ori %492, %497 : vector<8x1xi1>
    %c2_i32_110 = arith.constant 2 : i32
    %499 = arith.addi %485, %c2_i32_110 : i32
    %500 = arith.index_cast %499 : i32 to index
    %501 = memref.load %arg4[%500] : memref<64xi32, #tpu.memory_space<smem>>
    %502 = vector.broadcast %501 : i32 to vector<8x1xi32>
    %503 = arith.cmpi eq, %14, %502 : vector<8x1xi32>
    %504 = arith.ori %498, %503 : vector<8x1xi1>
    %c3_i32_111 = arith.constant 3 : i32
    %505 = arith.addi %485, %c3_i32_111 : i32
    %506 = arith.index_cast %505 : i32 to index
    %507 = memref.load %arg4[%506] : memref<64xi32, #tpu.memory_space<smem>>
    %508 = vector.broadcast %507 : i32 to vector<8x1xi32>
    %509 = arith.cmpi eq, %14, %508 : vector<8x1xi32>
    %510 = arith.ori %504, %509 : vector<8x1xi1>
    %cst_112 = arith.constant 0.000000e+00 : f32
    %511 = vector.shape_cast %510 : vector<8x1xi1> to vector<8x1xi1>
    %512 = vector.broadcast %511 : vector<8x1xi1> to vector<8x128xi1>
    %513 = vector.broadcast %cst_112 : f32 to vector<8x128xf32>
    %514 = arith.select %512, %11, %513 : vector<8x128xi1>, vector<8x128xf32>
    %cst_113 = arith.constant dense<0xFF800000> : vector<128xf32>
    %515 = vector.multi_reduction <maximumf>, %514, %cst_113 [0] : vector<8x128xf32> to vector<128xf32>
    %516 = vector.shape_cast %515 : vector<128xf32> to vector<1x128xf32>
    %517 = vector.broadcast %1 : f32 to vector<1x128xf32>
    %518 = arith.cmpf olt, %452, %517 : vector<1x128xf32>
    %519 = vector.broadcast %2 : f32 to vector<1x128xf32>
    %520 = arith.cmpf olt, %484, %519 : vector<1x128xf32>
    %521 = arith.andi %518, %520 : vector<1x128xi1>
    %522 = vector.broadcast %3 : f32 to vector<1x128xf32>
    %523 = arith.cmpf olt, %516, %522 : vector<1x128xf32>
    %524 = arith.andi %521, %523 : vector<1x128xi1>
    %525 = vector.broadcast %4 : f32 to vector<1x128xf32>
    %526 = arith.cmpf ogt, %452, %525 : vector<1x128xf32>
    %527 = vector.broadcast %5 : f32 to vector<1x128xf32>
    %528 = arith.cmpf ogt, %484, %527 : vector<1x128xf32>
    %529 = arith.ori %526, %528 : vector<1x128xi1>
    %530 = vector.broadcast %6 : f32 to vector<1x128xf32>
    %531 = arith.cmpf ogt, %516, %530 : vector<1x128xf32>
    %532 = arith.ori %529, %531 : vector<1x128xi1>
    %cst_114 = arith.constant 0.000000e+00 : f32
    %533 = vector.broadcast %8 : f32 to vector<1x128xf32>
    %534 = vector.broadcast %cst_114 : f32 to vector<1x128xf32>
    %535 = arith.select %532, %533, %534 : vector<1x128xi1>, vector<1x128xf32>
    %536 = vector.broadcast %7 : f32 to vector<1x128xf32>
    %537 = arith.select %524, %536, %535 : vector<1x128xi1>, vector<1x128xf32>
    %c3_115 = arith.constant 3 : index
    %c0_116 = arith.constant 0 : index
    %538 = vector.load %arg10[%c3_115, %c0_116] : memref<8x128xf32, #tpu.memory_space<vmem>>, vector<1x128xf32>
    tpu.vector_store %arg10[%c3_115, %c0_116], %537 {strides = array<i32>} : memref<8x128xf32, #tpu.memory_space<vmem>>, vector<1x128xf32>,
    %c4_i32_117 = arith.constant 4 : i32
    %539 = arith.addi %0, %c4_i32_117 : i32
    %c6_i32_118 = arith.constant 6 : i32
    %540 = arith.muli %539, %c6_i32_118 : i32
    %false_119 = arith.constant false
    %541 = vector.broadcast %false_119 : i1 to vector<16x1xi1>
    %c0_i32_120 = arith.constant 0 : i32
    %542 = arith.addi %540, %c0_i32_120 : i32
    %543 = arith.index_cast %542 : i32 to index
    %544 = memref.load %arg2[%543] : memref<96xi32, #tpu.memory_space<smem>>
    %545 = vector.broadcast %544 : i32 to vector<16x1xi32>
    %546 = arith.cmpi eq, %12, %545 : vector<16x1xi32>
    %547 = arith.ori %541, %546 : vector<16x1xi1>
    %c1_i32_121 = arith.constant 1 : i32
    %548 = arith.addi %540, %c1_i32_121 : i32
    %549 = arith.index_cast %548 : i32 to index
    %550 = memref.load %arg2[%549] : memref<96xi32, #tpu.memory_space<smem>>
    %551 = vector.broadcast %550 : i32 to vector<16x1xi32>
    %552 = arith.cmpi eq, %12, %551 : vector<16x1xi32>
    %553 = arith.ori %547, %552 : vector<16x1xi1>
    %c2_i32_122 = arith.constant 2 : i32
    %554 = arith.addi %540, %c2_i32_122 : i32
    %555 = arith.index_cast %554 : i32 to index
    %556 = memref.load %arg2[%555] : memref<96xi32, #tpu.memory_space<smem>>
    %557 = vector.broadcast %556 : i32 to vector<16x1xi32>
    %558 = arith.cmpi eq, %12, %557 : vector<16x1xi32>
    %559 = arith.ori %553, %558 : vector<16x1xi1>
    %c3_i32_123 = arith.constant 3 : i32
    %560 = arith.addi %540, %c3_i32_123 : i32
    %561 = arith.index_cast %560 : i32 to index
    %562 = memref.load %arg2[%561] : memref<96xi32, #tpu.memory_space<smem>>
    %563 = vector.broadcast %562 : i32 to vector<16x1xi32>
    %564 = arith.cmpi eq, %12, %563 : vector<16x1xi32>
    %565 = arith.ori %559, %564 : vector<16x1xi1>
    %c4_i32_124 = arith.constant 4 : i32
    %566 = arith.addi %540, %c4_i32_124 : i32
    %567 = arith.index_cast %566 : i32 to index
    %568 = memref.load %arg2[%567] : memref<96xi32, #tpu.memory_space<smem>>
    %569 = vector.broadcast %568 : i32 to vector<16x1xi32>
    %570 = arith.cmpi eq, %12, %569 : vector<16x1xi32>
    %571 = arith.ori %565, %570 : vector<16x1xi1>
    %c5_i32_125 = arith.constant 5 : i32
    %572 = arith.addi %540, %c5_i32_125 : i32
    %573 = arith.index_cast %572 : i32 to index
    %574 = memref.load %arg2[%573] : memref<96xi32, #tpu.memory_space<smem>>
    %575 = vector.broadcast %574 : i32 to vector<16x1xi32>
    %576 = arith.cmpi eq, %12, %575 : vector<16x1xi32>
    %577 = arith.ori %571, %576 : vector<16x1xi1>
    %cst_126 = arith.constant 0.000000e+00 : f32
    %578 = vector.shape_cast %577 : vector<16x1xi1> to vector<16x1xi1>
    %579 = vector.broadcast %578 : vector<16x1xi1> to vector<16x128xi1>
    %580 = vector.broadcast %cst_126 : f32 to vector<16x128xf32>
    %581 = arith.select %579, %9, %580 : vector<16x128xi1>, vector<16x128xf32>
    %cst_127 = arith.constant dense<0xFF800000> : vector<128xf32>
    %582 = vector.multi_reduction <maximumf>, %581, %cst_127 [0] : vector<16x128xf32> to vector<128xf32>
    %583 = vector.shape_cast %582 : vector<128xf32> to vector<1x128xf32>
    %c4_i32_128 = arith.constant 4 : i32
    %584 = arith.muli %539, %c4_i32_128 : i32
    %false_129 = arith.constant false
    %585 = vector.broadcast %false_129 : i1 to vector<8x1xi1>
    %c0_i32_130 = arith.constant 0 : i32
    %586 = arith.addi %584, %c0_i32_130 : i32
    %587 = arith.index_cast %586 : i32 to index
    %588 = memref.load %arg3[%587] : memref<64xi32, #tpu.memory_space<smem>>
    %589 = vector.broadcast %588 : i32 to vector<8x1xi32>
    %590 = arith.cmpi eq, %13, %589 : vector<8x1xi32>
    %591 = arith.ori %585, %590 : vector<8x1xi1>
    %c1_i32_131 = arith.constant 1 : i32
    %592 = arith.addi %584, %c1_i32_131 : i32
    %593 = arith.index_cast %592 : i32 to index
    %594 = memref.load %arg3[%593] : memref<64xi32, #tpu.memory_space<smem>>
    %595 = vector.broadcast %594 : i32 to vector<8x1xi32>
    %596 = arith.cmpi eq, %13, %595 : vector<8x1xi32>
    %597 = arith.ori %591, %596 : vector<8x1xi1>
    %c2_i32_132 = arith.constant 2 : i32
    %598 = arith.addi %584, %c2_i32_132 : i32
    %599 = arith.index_cast %598 : i32 to index
    %600 = memref.load %arg3[%599] : memref<64xi32, #tpu.memory_space<smem>>
    %601 = vector.broadcast %600 : i32 to vector<8x1xi32>
    %602 = arith.cmpi eq, %13, %601 : vector<8x1xi32>
    %603 = arith.ori %597, %602 : vector<8x1xi1>
    %c3_i32_133 = arith.constant 3 : i32
    %604 = arith.addi %584, %c3_i32_133 : i32
    %605 = arith.index_cast %604 : i32 to index
    %606 = memref.load %arg3[%605] : memref<64xi32, #tpu.memory_space<smem>>
    %607 = vector.broadcast %606 : i32 to vector<8x1xi32>
    %608 = arith.cmpi eq, %13, %607 : vector<8x1xi32>
    %609 = arith.ori %603, %608 : vector<8x1xi1>
    %cst_134 = arith.constant 0.000000e+00 : f32
    %610 = vector.shape_cast %609 : vector<8x1xi1> to vector<8x1xi1>
    %611 = vector.broadcast %610 : vector<8x1xi1> to vector<8x128xi1>
    %612 = vector.broadcast %cst_134 : f32 to vector<8x128xf32>
    %613 = arith.select %611, %10, %612 : vector<8x128xi1>, vector<8x128xf32>
    %cst_135 = arith.constant dense<0xFF800000> : vector<128xf32>
    %614 = vector.multi_reduction <maximumf>, %613, %cst_135 [0] : vector<8x128xf32> to vector<128xf32>
    %615 = vector.shape_cast %614 : vector<128xf32> to vector<1x128xf32>
    %c4_i32_136 = arith.constant 4 : i32
    %616 = arith.muli %539, %c4_i32_136 : i32
    %false_137 = arith.constant false
    %617 = vector.broadcast %false_137 : i1 to vector<8x1xi1>
    %c0_i32_138 = arith.constant 0 : i32
    %618 = arith.addi %616, %c0_i32_138 : i32
    %619 = arith.index_cast %618 : i32 to index
    %620 = memref.load %arg4[%619] : memref<64xi32, #tpu.memory_space<smem>>
    %621 = vector.broadcast %620 : i32 to vector<8x1xi32>
    %622 = arith.cmpi eq, %14, %621 : vector<8x1xi32>
    %623 = arith.ori %617, %622 : vector<8x1xi1>
    %c1_i32_139 = arith.constant 1 : i32
    %624 = arith.addi %616, %c1_i32_139 : i32
    %625 = arith.index_cast %624 : i32 to index
    %626 = memref.load %arg4[%625] : memref<64xi32, #tpu.memory_space<smem>>
    %627 = vector.broadcast %626 : i32 to vector<8x1xi32>
    %628 = arith.cmpi eq, %14, %627 : vector<8x1xi32>
    %629 = arith.ori %623, %628 : vector<8x1xi1>
    %c2_i32_140 = arith.constant 2 : i32
    %630 = arith.addi %616, %c2_i32_140 : i32
    %631 = arith.index_cast %630 : i32 to index
    %632 = memref.load %arg4[%631] : memref<64xi32, #tpu.memory_space<smem>>
    %633 = vector.broadcast %632 : i32 to vector<8x1xi32>
    %634 = arith.cmpi eq, %14, %633 : vector<8x1xi32>
    %635 = arith.ori %629, %634 : vector<8x1xi1>
    %c3_i32_141 = arith.constant 3 : i32
    %636 = arith.addi %616, %c3_i32_141 : i32
    %637 = arith.index_cast %636 : i32 to index
    %638 = memref.load %arg4[%637] : memref<64xi32, #tpu.memory_space<smem>>
    %639 = vector.broadcast %638 : i32 to vector<8x1xi32>
    %640 = arith.cmpi eq, %14, %639 : vector<8x1xi32>
    %641 = arith.ori %635, %640 : vector<8x1xi1>
    %cst_142 = arith.constant 0.000000e+00 : f32
    %642 = vector.shape_cast %641 : vector<8x1xi1> to vector<8x1xi1>
    %643 = vector.broadcast %642 : vector<8x1xi1> to vector<8x128xi1>
    %644 = vector.broadcast %cst_142 : f32 to vector<8x128xf32>
    %645 = arith.select %643, %11, %644 : vector<8x128xi1>, vector<8x128xf32>
    %cst_143 = arith.constant dense<0xFF800000> : vector<128xf32>
    %646 = vector.multi_reduction <maximumf>, %645, %cst_143 [0] : vector<8x128xf32> to vector<128xf32>
    %647 = vector.shape_cast %646 : vector<128xf32> to vector<1x128xf32>
    %648 = vector.broadcast %1 : f32 to vector<1x128xf32>
    %649 = arith.cmpf olt, %583, %648 : vector<1x128xf32>
    %650 = vector.broadcast %2 : f32 to vector<1x128xf32>
    %651 = arith.cmpf olt, %615, %650 : vector<1x128xf32>
    %652 = arith.andi %649, %651 : vector<1x128xi1>
    %653 = vector.broadcast %3 : f32 to vector<1x128xf32>
    %654 = arith.cmpf olt, %647, %653 : vector<1x128xf32>
    %655 = arith.andi %652, %654 : vector<1x128xi1>
    %656 = vector.broadcast %4 : f32 to vector<1x128xf32>
    %657 = arith.cmpf ogt, %583, %656 : vector<1x128xf32>
    %658 = vector.broadcast %5 : f32 to vector<1x128xf32>
    %659 = arith.cmpf ogt, %615, %658 : vector<1x128xf32>
    %660 = arith.ori %657, %659 : vector<1x128xi1>
    %661 = vector.broadcast %6 : f32 to vector<1x128xf32>
    %662 = arith.cmpf ogt, %647, %661 : vector<1x128xf32>
    %663 = arith.ori %660, %662 : vector<1x128xi1>
    %cst_144 = arith.constant 0.000000e+00 : f32
    %664 = vector.broadcast %8 : f32 to vector<1x128xf32>
    %665 = vector.broadcast %cst_144 : f32 to vector<1x128xf32>
    %666 = arith.select %663, %664, %665 : vector<1x128xi1>, vector<1x128xf32>
    %667 = vector.broadcast %7 : f32 to vector<1x128xf32>
    %668 = arith.select %655, %667, %666 : vector<1x128xi1>, vector<1x128xf32>
    %c4_145 = arith.constant 4 : index
    %c0_146 = arith.constant 0 : index
    %669 = vector.load %arg10[%c4_145, %c0_146] : memref<8x128xf32, #tpu.memory_space<vmem>>, vector<1x128xf32>
    tpu.vector_store %arg10[%c4_145, %c0_146], %668 {strides = array<i32>} : memref<8x128xf32, #tpu.memory_space<vmem>>, vector<1x128xf32>,
    %c5_i32_147 = arith.constant 5 : i32
    %670 = arith.addi %0, %c5_i32_147 : i32
    %c6_i32_148 = arith.constant 6 : i32
    %671 = arith.muli %670, %c6_i32_148 : i32
    %false_149 = arith.constant false
    %672 = vector.broadcast %false_149 : i1 to vector<16x1xi1>
    %c0_i32_150 = arith.constant 0 : i32
    %673 = arith.addi %671, %c0_i32_150 : i32
    %674 = arith.index_cast %673 : i32 to index
    %675 = memref.load %arg2[%674] : memref<96xi32, #tpu.memory_space<smem>>
    %676 = vector.broadcast %675 : i32 to vector<16x1xi32>
    %677 = arith.cmpi eq, %12, %676 : vector<16x1xi32>
    %678 = arith.ori %672, %677 : vector<16x1xi1>
    %c1_i32_151 = arith.constant 1 : i32
    %679 = arith.addi %671, %c1_i32_151 : i32
    %680 = arith.index_cast %679 : i32 to index
    %681 = memref.load %arg2[%680] : memref<96xi32, #tpu.memory_space<smem>>
    %682 = vector.broadcast %681 : i32 to vector<16x1xi32>
    %683 = arith.cmpi eq, %12, %682 : vector<16x1xi32>
    %684 = arith.ori %678, %683 : vector<16x1xi1>
    %c2_i32_152 = arith.constant 2 : i32
    %685 = arith.addi %671, %c2_i32_152 : i32
    %686 = arith.index_cast %685 : i32 to index
    %687 = memref.load %arg2[%686] : memref<96xi32, #tpu.memory_space<smem>>
    %688 = vector.broadcast %687 : i32 to vector<16x1xi32>
    %689 = arith.cmpi eq, %12, %688 : vector<16x1xi32>
    %690 = arith.ori %684, %689 : vector<16x1xi1>
    %c3_i32_153 = arith.constant 3 : i32
    %691 = arith.addi %671, %c3_i32_153 : i32
    %692 = arith.index_cast %691 : i32 to index
    %693 = memref.load %arg2[%692] : memref<96xi32, #tpu.memory_space<smem>>
    %694 = vector.broadcast %693 : i32 to vector<16x1xi32>
    %695 = arith.cmpi eq, %12, %694 : vector<16x1xi32>
    %696 = arith.ori %690, %695 : vector<16x1xi1>
    %c4_i32_154 = arith.constant 4 : i32
    %697 = arith.addi %671, %c4_i32_154 : i32
    %698 = arith.index_cast %697 : i32 to index
    %699 = memref.load %arg2[%698] : memref<96xi32, #tpu.memory_space<smem>>
    %700 = vector.broadcast %699 : i32 to vector<16x1xi32>
    %701 = arith.cmpi eq, %12, %700 : vector<16x1xi32>
    %702 = arith.ori %696, %701 : vector<16x1xi1>
    %c5_i32_155 = arith.constant 5 : i32
    %703 = arith.addi %671, %c5_i32_155 : i32
    %704 = arith.index_cast %703 : i32 to index
    %705 = memref.load %arg2[%704] : memref<96xi32, #tpu.memory_space<smem>>
    %706 = vector.broadcast %705 : i32 to vector<16x1xi32>
    %707 = arith.cmpi eq, %12, %706 : vector<16x1xi32>
    %708 = arith.ori %702, %707 : vector<16x1xi1>
    %cst_156 = arith.constant 0.000000e+00 : f32
    %709 = vector.shape_cast %708 : vector<16x1xi1> to vector<16x1xi1>
    %710 = vector.broadcast %709 : vector<16x1xi1> to vector<16x128xi1>
    %711 = vector.broadcast %cst_156 : f32 to vector<16x128xf32>
    %712 = arith.select %710, %9, %711 : vector<16x128xi1>, vector<16x128xf32>
    %cst_157 = arith.constant dense<0xFF800000> : vector<128xf32>
    %713 = vector.multi_reduction <maximumf>, %712, %cst_157 [0] : vector<16x128xf32> to vector<128xf32>
    %714 = vector.shape_cast %713 : vector<128xf32> to vector<1x128xf32>
    %c4_i32_158 = arith.constant 4 : i32
    %715 = arith.muli %670, %c4_i32_158 : i32
    %false_159 = arith.constant false
    %716 = vector.broadcast %false_159 : i1 to vector<8x1xi1>
    %c0_i32_160 = arith.constant 0 : i32
    %717 = arith.addi %715, %c0_i32_160 : i32
    %718 = arith.index_cast %717 : i32 to index
    %719 = memref.load %arg3[%718] : memref<64xi32, #tpu.memory_space<smem>>
    %720 = vector.broadcast %719 : i32 to vector<8x1xi32>
    %721 = arith.cmpi eq, %13, %720 : vector<8x1xi32>
    %722 = arith.ori %716, %721 : vector<8x1xi1>
    %c1_i32_161 = arith.constant 1 : i32
    %723 = arith.addi %715, %c1_i32_161 : i32
    %724 = arith.index_cast %723 : i32 to index
    %725 = memref.load %arg3[%724] : memref<64xi32, #tpu.memory_space<smem>>
    %726 = vector.broadcast %725 : i32 to vector<8x1xi32>
    %727 = arith.cmpi eq, %13, %726 : vector<8x1xi32>
    %728 = arith.ori %722, %727 : vector<8x1xi1>
    %c2_i32_162 = arith.constant 2 : i32
    %729 = arith.addi %715, %c2_i32_162 : i32
    %730 = arith.index_cast %729 : i32 to index
    %731 = memref.load %arg3[%730] : memref<64xi32, #tpu.memory_space<smem>>
    %732 = vector.broadcast %731 : i32 to vector<8x1xi32>
    %733 = arith.cmpi eq, %13, %732 : vector<8x1xi32>
    %734 = arith.ori %728, %733 : vector<8x1xi1>
    %c3_i32_163 = arith.constant 3 : i32
    %735 = arith.addi %715, %c3_i32_163 : i32
    %736 = arith.index_cast %735 : i32 to index
    %737 = memref.load %arg3[%736] : memref<64xi32, #tpu.memory_space<smem>>
    %738 = vector.broadcast %737 : i32 to vector<8x1xi32>
    %739 = arith.cmpi eq, %13, %738 : vector<8x1xi32>
    %740 = arith.ori %734, %739 : vector<8x1xi1>
    %cst_164 = arith.constant 0.000000e+00 : f32
    %741 = vector.shape_cast %740 : vector<8x1xi1> to vector<8x1xi1>
    %742 = vector.broadcast %741 : vector<8x1xi1> to vector<8x128xi1>
    %743 = vector.broadcast %cst_164 : f32 to vector<8x128xf32>
    %744 = arith.select %742, %10, %743 : vector<8x128xi1>, vector<8x128xf32>
    %cst_165 = arith.constant dense<0xFF800000> : vector<128xf32>
    %745 = vector.multi_reduction <maximumf>, %744, %cst_165 [0] : vector<8x128xf32> to vector<128xf32>
    %746 = vector.shape_cast %745 : vector<128xf32> to vector<1x128xf32>
    %c4_i32_166 = arith.constant 4 : i32
    %747 = arith.muli %670, %c4_i32_166 : i32
    %false_167 = arith.constant false
    %748 = vector.broadcast %false_167 : i1 to vector<8x1xi1>
    %c0_i32_168 = arith.constant 0 : i32
    %749 = arith.addi %747, %c0_i32_168 : i32
    %750 = arith.index_cast %749 : i32 to index
    %751 = memref.load %arg4[%750] : memref<64xi32, #tpu.memory_space<smem>>
    %752 = vector.broadcast %751 : i32 to vector<8x1xi32>
    %753 = arith.cmpi eq, %14, %752 : vector<8x1xi32>
    %754 = arith.ori %748, %753 : vector<8x1xi1>
    %c1_i32_169 = arith.constant 1 : i32
    %755 = arith.addi %747, %c1_i32_169 : i32
    %756 = arith.index_cast %755 : i32 to index
    %757 = memref.load %arg4[%756] : memref<64xi32, #tpu.memory_space<smem>>
    %758 = vector.broadcast %757 : i32 to vector<8x1xi32>
    %759 = arith.cmpi eq, %14, %758 : vector<8x1xi32>
    %760 = arith.ori %754, %759 : vector<8x1xi1>
    %c2_i32_170 = arith.constant 2 : i32
    %761 = arith.addi %747, %c2_i32_170 : i32
    %762 = arith.index_cast %761 : i32 to index
    %763 = memref.load %arg4[%762] : memref<64xi32, #tpu.memory_space<smem>>
    %764 = vector.broadcast %763 : i32 to vector<8x1xi32>
    %765 = arith.cmpi eq, %14, %764 : vector<8x1xi32>
    %766 = arith.ori %760, %765 : vector<8x1xi1>
    %c3_i32_171 = arith.constant 3 : i32
    %767 = arith.addi %747, %c3_i32_171 : i32
    %768 = arith.index_cast %767 : i32 to index
    %769 = memref.load %arg4[%768] : memref<64xi32, #tpu.memory_space<smem>>
    %770 = vector.broadcast %769 : i32 to vector<8x1xi32>
    %771 = arith.cmpi eq, %14, %770 : vector<8x1xi32>
    %772 = arith.ori %766, %771 : vector<8x1xi1>
    %cst_172 = arith.constant 0.000000e+00 : f32
    %773 = vector.shape_cast %772 : vector<8x1xi1> to vector<8x1xi1>
    %774 = vector.broadcast %773 : vector<8x1xi1> to vector<8x128xi1>
    %775 = vector.broadcast %cst_172 : f32 to vector<8x128xf32>
    %776 = arith.select %774, %11, %775 : vector<8x128xi1>, vector<8x128xf32>
    %cst_173 = arith.constant dense<0xFF800000> : vector<128xf32>
    %777 = vector.multi_reduction <maximumf>, %776, %cst_173 [0] : vector<8x128xf32> to vector<128xf32>
    %778 = vector.shape_cast %777 : vector<128xf32> to vector<1x128xf32>
    %779 = vector.broadcast %1 : f32 to vector<1x128xf32>
    %780 = arith.cmpf olt, %714, %779 : vector<1x128xf32>
    %781 = vector.broadcast %2 : f32 to vector<1x128xf32>
    %782 = arith.cmpf olt, %746, %781 : vector<1x128xf32>
    %783 = arith.andi %780, %782 : vector<1x128xi1>
    %784 = vector.broadcast %3 : f32 to vector<1x128xf32>
    %785 = arith.cmpf olt, %778, %784 : vector<1x128xf32>
    %786 = arith.andi %783, %785 : vector<1x128xi1>
    %787 = vector.broadcast %4 : f32 to vector<1x128xf32>
    %788 = arith.cmpf ogt, %714, %787 : vector<1x128xf32>
    %789 = vector.broadcast %5 : f32 to vector<1x128xf32>
    %790 = arith.cmpf ogt, %746, %789 : vector<1x128xf32>
    %791 = arith.ori %788, %790 : vector<1x128xi1>
    %792 = vector.broadcast %6 : f32 to vector<1x128xf32>
    %793 = arith.cmpf ogt, %778, %792 : vector<1x128xf32>
    %794 = arith.ori %791, %793 : vector<1x128xi1>
    %cst_174 = arith.constant 0.000000e+00 : f32
    %795 = vector.broadcast %8 : f32 to vector<1x128xf32>
    %796 = vector.broadcast %cst_174 : f32 to vector<1x128xf32>
    %797 = arith.select %794, %795, %796 : vector<1x128xi1>, vector<1x128xf32>
    %798 = vector.broadcast %7 : f32 to vector<1x128xf32>
    %799 = arith.select %786, %798, %797 : vector<1x128xi1>, vector<1x128xf32>
    %c5_175 = arith.constant 5 : index
    %c0_176 = arith.constant 0 : index
    %800 = vector.load %arg10[%c5_175, %c0_176] : memref<8x128xf32, #tpu.memory_space<vmem>>, vector<1x128xf32>
    tpu.vector_store %arg10[%c5_175, %c0_176], %799 {strides = array<i32>} : memref<8x128xf32, #tpu.memory_space<vmem>>, vector<1x128xf32>,
    %c6_i32_177 = arith.constant 6 : i32
    %801 = arith.addi %0, %c6_i32_177 : i32
    %c6_i32_178 = arith.constant 6 : i32
    %802 = arith.muli %801, %c6_i32_178 : i32
    %false_179 = arith.constant false
    %803 = vector.broadcast %false_179 : i1 to vector<16x1xi1>
    %c0_i32_180 = arith.constant 0 : i32
    %804 = arith.addi %802, %c0_i32_180 : i32
    %805 = arith.index_cast %804 : i32 to index
    %806 = memref.load %arg2[%805] : memref<96xi32, #tpu.memory_space<smem>>
    %807 = vector.broadcast %806 : i32 to vector<16x1xi32>
    %808 = arith.cmpi eq, %12, %807 : vector<16x1xi32>
    %809 = arith.ori %803, %808 : vector<16x1xi1>
    %c1_i32_181 = arith.constant 1 : i32
    %810 = arith.addi %802, %c1_i32_181 : i32
    %811 = arith.index_cast %810 : i32 to index
    %812 = memref.load %arg2[%811] : memref<96xi32, #tpu.memory_space<smem>>
    %813 = vector.broadcast %812 : i32 to vector<16x1xi32>
    %814 = arith.cmpi eq, %12, %813 : vector<16x1xi32>
    %815 = arith.ori %809, %814 : vector<16x1xi1>
    %c2_i32_182 = arith.constant 2 : i32
    %816 = arith.addi %802, %c2_i32_182 : i32
    %817 = arith.index_cast %816 : i32 to index
    %818 = memref.load %arg2[%817] : memref<96xi32, #tpu.memory_space<smem>>
    %819 = vector.broadcast %818 : i32 to vector<16x1xi32>
    %820 = arith.cmpi eq, %12, %819 : vector<16x1xi32>
    %821 = arith.ori %815, %820 : vector<16x1xi1>
    %c3_i32_183 = arith.constant 3 : i32
    %822 = arith.addi %802, %c3_i32_183 : i32
    %823 = arith.index_cast %822 : i32 to index
    %824 = memref.load %arg2[%823] : memref<96xi32, #tpu.memory_space<smem>>
    %825 = vector.broadcast %824 : i32 to vector<16x1xi32>
    %826 = arith.cmpi eq, %12, %825 : vector<16x1xi32>
    %827 = arith.ori %821, %826 : vector<16x1xi1>
    %c4_i32_184 = arith.constant 4 : i32
    %828 = arith.addi %802, %c4_i32_184 : i32
    %829 = arith.index_cast %828 : i32 to index
    %830 = memref.load %arg2[%829] : memref<96xi32, #tpu.memory_space<smem>>
    %831 = vector.broadcast %830 : i32 to vector<16x1xi32>
    %832 = arith.cmpi eq, %12, %831 : vector<16x1xi32>
    %833 = arith.ori %827, %832 : vector<16x1xi1>
    %c5_i32_185 = arith.constant 5 : i32
    %834 = arith.addi %802, %c5_i32_185 : i32
    %835 = arith.index_cast %834 : i32 to index
    %836 = memref.load %arg2[%835] : memref<96xi32, #tpu.memory_space<smem>>
    %837 = vector.broadcast %836 : i32 to vector<16x1xi32>
    %838 = arith.cmpi eq, %12, %837 : vector<16x1xi32>
    %839 = arith.ori %833, %838 : vector<16x1xi1>
    %cst_186 = arith.constant 0.000000e+00 : f32
    %840 = vector.shape_cast %839 : vector<16x1xi1> to vector<16x1xi1>
    %841 = vector.broadcast %840 : vector<16x1xi1> to vector<16x128xi1>
    %842 = vector.broadcast %cst_186 : f32 to vector<16x128xf32>
    %843 = arith.select %841, %9, %842 : vector<16x128xi1>, vector<16x128xf32>
    %cst_187 = arith.constant dense<0xFF800000> : vector<128xf32>
    %844 = vector.multi_reduction <maximumf>, %843, %cst_187 [0] : vector<16x128xf32> to vector<128xf32>
    %845 = vector.shape_cast %844 : vector<128xf32> to vector<1x128xf32>
    %c4_i32_188 = arith.constant 4 : i32
    %846 = arith.muli %801, %c4_i32_188 : i32
    %false_189 = arith.constant false
    %847 = vector.broadcast %false_189 : i1 to vector<8x1xi1>
    %c0_i32_190 = arith.constant 0 : i32
    %848 = arith.addi %846, %c0_i32_190 : i32
    %849 = arith.index_cast %848 : i32 to index
    %850 = memref.load %arg3[%849] : memref<64xi32, #tpu.memory_space<smem>>
    %851 = vector.broadcast %850 : i32 to vector<8x1xi32>
    %852 = arith.cmpi eq, %13, %851 : vector<8x1xi32>
    %853 = arith.ori %847, %852 : vector<8x1xi1>
    %c1_i32_191 = arith.constant 1 : i32
    %854 = arith.addi %846, %c1_i32_191 : i32
    %855 = arith.index_cast %854 : i32 to index
    %856 = memref.load %arg3[%855] : memref<64xi32, #tpu.memory_space<smem>>
    %857 = vector.broadcast %856 : i32 to vector<8x1xi32>
    %858 = arith.cmpi eq, %13, %857 : vector<8x1xi32>
    %859 = arith.ori %853, %858 : vector<8x1xi1>
    %c2_i32_192 = arith.constant 2 : i32
    %860 = arith.addi %846, %c2_i32_192 : i32
    %861 = arith.index_cast %860 : i32 to index
    %862 = memref.load %arg3[%861] : memref<64xi32, #tpu.memory_space<smem>>
    %863 = vector.broadcast %862 : i32 to vector<8x1xi32>
    %864 = arith.cmpi eq, %13, %863 : vector<8x1xi32>
    %865 = arith.ori %859, %864 : vector<8x1xi1>
    %c3_i32_193 = arith.constant 3 : i32
    %866 = arith.addi %846, %c3_i32_193 : i32
    %867 = arith.index_cast %866 : i32 to index
    %868 = memref.load %arg3[%867] : memref<64xi32, #tpu.memory_space<smem>>
    %869 = vector.broadcast %868 : i32 to vector<8x1xi32>
    %870 = arith.cmpi eq, %13, %869 : vector<8x1xi32>
    %871 = arith.ori %865, %870 : vector<8x1xi1>
    %cst_194 = arith.constant 0.000000e+00 : f32
    %872 = vector.shape_cast %871 : vector<8x1xi1> to vector<8x1xi1>
    %873 = vector.broadcast %872 : vector<8x1xi1> to vector<8x128xi1>
    %874 = vector.broadcast %cst_194 : f32 to vector<8x128xf32>
    %875 = arith.select %873, %10, %874 : vector<8x128xi1>, vector<8x128xf32>
    %cst_195 = arith.constant dense<0xFF800000> : vector<128xf32>
    %876 = vector.multi_reduction <maximumf>, %875, %cst_195 [0] : vector<8x128xf32> to vector<128xf32>
    %877 = vector.shape_cast %876 : vector<128xf32> to vector<1x128xf32>
    %c4_i32_196 = arith.constant 4 : i32
    %878 = arith.muli %801, %c4_i32_196 : i32
    %false_197 = arith.constant false
    %879 = vector.broadcast %false_197 : i1 to vector<8x1xi1>
    %c0_i32_198 = arith.constant 0 : i32
    %880 = arith.addi %878, %c0_i32_198 : i32
    %881 = arith.index_cast %880 : i32 to index
    %882 = memref.load %arg4[%881] : memref<64xi32, #tpu.memory_space<smem>>
    %883 = vector.broadcast %882 : i32 to vector<8x1xi32>
    %884 = arith.cmpi eq, %14, %883 : vector<8x1xi32>
    %885 = arith.ori %879, %884 : vector<8x1xi1>
    %c1_i32_199 = arith.constant 1 : i32
    %886 = arith.addi %878, %c1_i32_199 : i32
    %887 = arith.index_cast %886 : i32 to index
    %888 = memref.load %arg4[%887] : memref<64xi32, #tpu.memory_space<smem>>
    %889 = vector.broadcast %888 : i32 to vector<8x1xi32>
    %890 = arith.cmpi eq, %14, %889 : vector<8x1xi32>
    %891 = arith.ori %885, %890 : vector<8x1xi1>
    %c2_i32_200 = arith.constant 2 : i32
    %892 = arith.addi %878, %c2_i32_200 : i32
    %893 = arith.index_cast %892 : i32 to index
    %894 = memref.load %arg4[%893] : memref<64xi32, #tpu.memory_space<smem>>
    %895 = vector.broadcast %894 : i32 to vector<8x1xi32>
    %896 = arith.cmpi eq, %14, %895 : vector<8x1xi32>
    %897 = arith.ori %891, %896 : vector<8x1xi1>
    %c3_i32_201 = arith.constant 3 : i32
    %898 = arith.addi %878, %c3_i32_201 : i32
    %899 = arith.index_cast %898 : i32 to index
    %900 = memref.load %arg4[%899] : memref<64xi32, #tpu.memory_space<smem>>
    %901 = vector.broadcast %900 : i32 to vector<8x1xi32>
    %902 = arith.cmpi eq, %14, %901 : vector<8x1xi32>
    %903 = arith.ori %897, %902 : vector<8x1xi1>
    %cst_202 = arith.constant 0.000000e+00 : f32
    %904 = vector.shape_cast %903 : vector<8x1xi1> to vector<8x1xi1>
    %905 = vector.broadcast %904 : vector<8x1xi1> to vector<8x128xi1>
    %906 = vector.broadcast %cst_202 : f32 to vector<8x128xf32>
    %907 = arith.select %905, %11, %906 : vector<8x128xi1>, vector<8x128xf32>
    %cst_203 = arith.constant dense<0xFF800000> : vector<128xf32>
    %908 = vector.multi_reduction <maximumf>, %907, %cst_203 [0] : vector<8x128xf32> to vector<128xf32>
    %909 = vector.shape_cast %908 : vector<128xf32> to vector<1x128xf32>
    %910 = vector.broadcast %1 : f32 to vector<1x128xf32>
    %911 = arith.cmpf olt, %845, %910 : vector<1x128xf32>
    %912 = vector.broadcast %2 : f32 to vector<1x128xf32>
    %913 = arith.cmpf olt, %877, %912 : vector<1x128xf32>
    %914 = arith.andi %911, %913 : vector<1x128xi1>
    %915 = vector.broadcast %3 : f32 to vector<1x128xf32>
    %916 = arith.cmpf olt, %909, %915 : vector<1x128xf32>
    %917 = arith.andi %914, %916 : vector<1x128xi1>
    %918 = vector.broadcast %4 : f32 to vector<1x128xf32>
    %919 = arith.cmpf ogt, %845, %918 : vector<1x128xf32>
    %920 = vector.broadcast %5 : f32 to vector<1x128xf32>
    %921 = arith.cmpf ogt, %877, %920 : vector<1x128xf32>
    %922 = arith.ori %919, %921 : vector<1x128xi1>
    %923 = vector.broadcast %6 : f32 to vector<1x128xf32>
    %924 = arith.cmpf ogt, %909, %923 : vector<1x128xf32>
    %925 = arith.ori %922, %924 : vector<1x128xi1>
    %cst_204 = arith.constant 0.000000e+00 : f32
    %926 = vector.broadcast %8 : f32 to vector<1x128xf32>
    %927 = vector.broadcast %cst_204 : f32 to vector<1x128xf32>
    %928 = arith.select %925, %926, %927 : vector<1x128xi1>, vector<1x128xf32>
    %929 = vector.broadcast %7 : f32 to vector<1x128xf32>
    %930 = arith.select %917, %929, %928 : vector<1x128xi1>, vector<1x128xf32>
    %c6_205 = arith.constant 6 : index
    %c0_206 = arith.constant 0 : index
    %931 = vector.load %arg10[%c6_205, %c0_206] : memref<8x128xf32, #tpu.memory_space<vmem>>, vector<1x128xf32>
    tpu.vector_store %arg10[%c6_205, %c0_206], %930 {strides = array<i32>} : memref<8x128xf32, #tpu.memory_space<vmem>>, vector<1x128xf32>,
    %c7_i32 = arith.constant 7 : i32
    %932 = arith.addi %0, %c7_i32 : i32
    %c6_i32_207 = arith.constant 6 : i32
    %933 = arith.muli %932, %c6_i32_207 : i32
    %false_208 = arith.constant false
    %934 = vector.broadcast %false_208 : i1 to vector<16x1xi1>
    %c0_i32_209 = arith.constant 0 : i32
    %935 = arith.addi %933, %c0_i32_209 : i32
    %936 = arith.index_cast %935 : i32 to index
    %937 = memref.load %arg2[%936] : memref<96xi32, #tpu.memory_space<smem>>
    %938 = vector.broadcast %937 : i32 to vector<16x1xi32>
    %939 = arith.cmpi eq, %12, %938 : vector<16x1xi32>
    %940 = arith.ori %934, %939 : vector<16x1xi1>
    %c1_i32_210 = arith.constant 1 : i32
    %941 = arith.addi %933, %c1_i32_210 : i32
    %942 = arith.index_cast %941 : i32 to index
    %943 = memref.load %arg2[%942] : memref<96xi32, #tpu.memory_space<smem>>
    %944 = vector.broadcast %943 : i32 to vector<16x1xi32>
    %945 = arith.cmpi eq, %12, %944 : vector<16x1xi32>
    %946 = arith.ori %940, %945 : vector<16x1xi1>
    %c2_i32_211 = arith.constant 2 : i32
    %947 = arith.addi %933, %c2_i32_211 : i32
    %948 = arith.index_cast %947 : i32 to index
    %949 = memref.load %arg2[%948] : memref<96xi32, #tpu.memory_space<smem>>
    %950 = vector.broadcast %949 : i32 to vector<16x1xi32>
    %951 = arith.cmpi eq, %12, %950 : vector<16x1xi32>
    %952 = arith.ori %946, %951 : vector<16x1xi1>
    %c3_i32_212 = arith.constant 3 : i32
    %953 = arith.addi %933, %c3_i32_212 : i32
    %954 = arith.index_cast %953 : i32 to index
    %955 = memref.load %arg2[%954] : memref<96xi32, #tpu.memory_space<smem>>
    %956 = vector.broadcast %955 : i32 to vector<16x1xi32>
    %957 = arith.cmpi eq, %12, %956 : vector<16x1xi32>
    %958 = arith.ori %952, %957 : vector<16x1xi1>
    %c4_i32_213 = arith.constant 4 : i32
    %959 = arith.addi %933, %c4_i32_213 : i32
    %960 = arith.index_cast %959 : i32 to index
    %961 = memref.load %arg2[%960] : memref<96xi32, #tpu.memory_space<smem>>
    %962 = vector.broadcast %961 : i32 to vector<16x1xi32>
    %963 = arith.cmpi eq, %12, %962 : vector<16x1xi32>
    %964 = arith.ori %958, %963 : vector<16x1xi1>
    %c5_i32_214 = arith.constant 5 : i32
    %965 = arith.addi %933, %c5_i32_214 : i32
    %966 = arith.index_cast %965 : i32 to index
    %967 = memref.load %arg2[%966] : memref<96xi32, #tpu.memory_space<smem>>
    %968 = vector.broadcast %967 : i32 to vector<16x1xi32>
    %969 = arith.cmpi eq, %12, %968 : vector<16x1xi32>
    %970 = arith.ori %964, %969 : vector<16x1xi1>
    %cst_215 = arith.constant 0.000000e+00 : f32
    %971 = vector.shape_cast %970 : vector<16x1xi1> to vector<16x1xi1>
    %972 = vector.broadcast %971 : vector<16x1xi1> to vector<16x128xi1>
    %973 = vector.broadcast %cst_215 : f32 to vector<16x128xf32>
    %974 = arith.select %972, %9, %973 : vector<16x128xi1>, vector<16x128xf32>
    %cst_216 = arith.constant dense<0xFF800000> : vector<128xf32>
    %975 = vector.multi_reduction <maximumf>, %974, %cst_216 [0] : vector<16x128xf32> to vector<128xf32>
    %976 = vector.shape_cast %975 : vector<128xf32> to vector<1x128xf32>
    %c4_i32_217 = arith.constant 4 : i32
    %977 = arith.muli %932, %c4_i32_217 : i32
    %false_218 = arith.constant false
    %978 = vector.broadcast %false_218 : i1 to vector<8x1xi1>
    %c0_i32_219 = arith.constant 0 : i32
    %979 = arith.addi %977, %c0_i32_219 : i32
    %980 = arith.index_cast %979 : i32 to index
    %981 = memref.load %arg3[%980] : memref<64xi32, #tpu.memory_space<smem>>
    %982 = vector.broadcast %981 : i32 to vector<8x1xi32>
    %983 = arith.cmpi eq, %13, %982 : vector<8x1xi32>
    %984 = arith.ori %978, %983 : vector<8x1xi1>
    %c1_i32_220 = arith.constant 1 : i32
    %985 = arith.addi %977, %c1_i32_220 : i32
    %986 = arith.index_cast %985 : i32 to index
    %987 = memref.load %arg3[%986] : memref<64xi32, #tpu.memory_space<smem>>
    %988 = vector.broadcast %987 : i32 to vector<8x1xi32>
    %989 = arith.cmpi eq, %13, %988 : vector<8x1xi32>
    %990 = arith.ori %984, %989 : vector<8x1xi1>
    %c2_i32_221 = arith.constant 2 : i32
    %991 = arith.addi %977, %c2_i32_221 : i32
    %992 = arith.index_cast %991 : i32 to index
    %993 = memref.load %arg3[%992] : memref<64xi32, #tpu.memory_space<smem>>
    %994 = vector.broadcast %993 : i32 to vector<8x1xi32>
    %995 = arith.cmpi eq, %13, %994 : vector<8x1xi32>
    %996 = arith.ori %990, %995 : vector<8x1xi1>
    %c3_i32_222 = arith.constant 3 : i32
    %997 = arith.addi %977, %c3_i32_222 : i32
    %998 = arith.index_cast %997 : i32 to index
    %999 = memref.load %arg3[%998] : memref<64xi32, #tpu.memory_space<smem>>
    %1000 = vector.broadcast %999 : i32 to vector<8x1xi32>
    %1001 = arith.cmpi eq, %13, %1000 : vector<8x1xi32>
    %1002 = arith.ori %996, %1001 : vector<8x1xi1>
    %cst_223 = arith.constant 0.000000e+00 : f32
    %1003 = vector.shape_cast %1002 : vector<8x1xi1> to vector<8x1xi1>
    %1004 = vector.broadcast %1003 : vector<8x1xi1> to vector<8x128xi1>
    %1005 = vector.broadcast %cst_223 : f32 to vector<8x128xf32>
    %1006 = arith.select %1004, %10, %1005 : vector<8x128xi1>, vector<8x128xf32>
    %cst_224 = arith.constant dense<0xFF800000> : vector<128xf32>
    %1007 = vector.multi_reduction <maximumf>, %1006, %cst_224 [0] : vector<8x128xf32> to vector<128xf32>
    %1008 = vector.shape_cast %1007 : vector<128xf32> to vector<1x128xf32>
    %c4_i32_225 = arith.constant 4 : i32
    %1009 = arith.muli %932, %c4_i32_225 : i32
    %false_226 = arith.constant false
    %1010 = vector.broadcast %false_226 : i1 to vector<8x1xi1>
    %c0_i32_227 = arith.constant 0 : i32
    %1011 = arith.addi %1009, %c0_i32_227 : i32
    %1012 = arith.index_cast %1011 : i32 to index
    %1013 = memref.load %arg4[%1012] : memref<64xi32, #tpu.memory_space<smem>>
    %1014 = vector.broadcast %1013 : i32 to vector<8x1xi32>
    %1015 = arith.cmpi eq, %14, %1014 : vector<8x1xi32>
    %1016 = arith.ori %1010, %1015 : vector<8x1xi1>
    %c1_i32_228 = arith.constant 1 : i32
    %1017 = arith.addi %1009, %c1_i32_228 : i32
    %1018 = arith.index_cast %1017 : i32 to index
    %1019 = memref.load %arg4[%1018] : memref<64xi32, #tpu.memory_space<smem>>
    %1020 = vector.broadcast %1019 : i32 to vector<8x1xi32>
    %1021 = arith.cmpi eq, %14, %1020 : vector<8x1xi32>
    %1022 = arith.ori %1016, %1021 : vector<8x1xi1>
    %c2_i32_229 = arith.constant 2 : i32
    %1023 = arith.addi %1009, %c2_i32_229 : i32
    %1024 = arith.index_cast %1023 : i32 to index
    %1025 = memref.load %arg4[%1024] : memref<64xi32, #tpu.memory_space<smem>>
    %1026 = vector.broadcast %1025 : i32 to vector<8x1xi32>
    %1027 = arith.cmpi eq, %14, %1026 : vector<8x1xi32>
    %1028 = arith.ori %1022, %1027 : vector<8x1xi1>
    %c3_i32_230 = arith.constant 3 : i32
    %1029 = arith.addi %1009, %c3_i32_230 : i32
    %1030 = arith.index_cast %1029 : i32 to index
    %1031 = memref.load %arg4[%1030] : memref<64xi32, #tpu.memory_space<smem>>
    %1032 = vector.broadcast %1031 : i32 to vector<8x1xi32>
    %1033 = arith.cmpi eq, %14, %1032 : vector<8x1xi32>
    %1034 = arith.ori %1028, %1033 : vector<8x1xi1>
    %cst_231 = arith.constant 0.000000e+00 : f32
    %1035 = vector.shape_cast %1034 : vector<8x1xi1> to vector<8x1xi1>
    %1036 = vector.broadcast %1035 : vector<8x1xi1> to vector<8x128xi1>
    %1037 = vector.broadcast %cst_231 : f32 to vector<8x128xf32>
    %1038 = arith.select %1036, %11, %1037 : vector<8x128xi1>, vector<8x128xf32>
    %cst_232 = arith.constant dense<0xFF800000> : vector<128xf32>
    %1039 = vector.multi_reduction <maximumf>, %1038, %cst_232 [0] : vector<8x128xf32> to vector<128xf32>
    %1040 = vector.shape_cast %1039 : vector<128xf32> to vector<1x128xf32>
    %1041 = vector.broadcast %1 : f32 to vector<1x128xf32>
    %1042 = arith.cmpf olt, %976, %1041 : vector<1x128xf32>
    %1043 = vector.broadcast %2 : f32 to vector<1x128xf32>
    %1044 = arith.cmpf olt, %1008, %1043 : vector<1x128xf32>
    %1045 = arith.andi %1042, %1044 : vector<1x128xi1>
    %1046 = vector.broadcast %3 : f32 to vector<1x128xf32>
    %1047 = arith.cmpf olt, %1040, %1046 : vector<1x128xf32>
    %1048 = arith.andi %1045, %1047 : vector<1x128xi1>
    %1049 = vector.broadcast %4 : f32 to vector<1x128xf32>
    %1050 = arith.cmpf ogt, %976, %1049 : vector<1x128xf32>
    %1051 = vector.broadcast %5 : f32 to vector<1x128xf32>
    %1052 = arith.cmpf ogt, %1008, %1051 : vector<1x128xf32>
    %1053 = arith.ori %1050, %1052 : vector<1x128xi1>
    %1054 = vector.broadcast %6 : f32 to vector<1x128xf32>
    %1055 = arith.cmpf ogt, %1040, %1054 : vector<1x128xf32>
    %1056 = arith.ori %1053, %1055 : vector<1x128xi1>
    %cst_233 = arith.constant 0.000000e+00 : f32
    %1057 = vector.broadcast %8 : f32 to vector<1x128xf32>
    %1058 = vector.broadcast %cst_233 : f32 to vector<1x128xf32>
    %1059 = arith.select %1056, %1057, %1058 : vector<1x128xi1>, vector<1x128xf32>
    %1060 = vector.broadcast %7 : f32 to vector<1x128xf32>
    %1061 = arith.select %1048, %1060, %1059 : vector<1x128xi1>, vector<1x128xf32>
    %c7_234 = arith.constant 7 : index
    %c0_235 = arith.constant 0 : index
    %1062 = vector.load %arg10[%c7_234, %c0_235] : memref<8x128xf32, #tpu.memory_space<vmem>>, vector<1x128xf32>
    tpu.vector_store %arg10[%c7_234, %c0_235], %1061 {strides = array<i32>} : memref<8x128xf32, #tpu.memory_space<vmem>>, vector<1x128xf32>,
    %c0_236 = arith.constant 0 : index
    %c0_237 = arith.constant 0 : index
    %1063 = vector.load %arg5[%c0_236, %c0_237] : memref<8x128xf32, #tpu.memory_space<vmem>>, vector<8x128xf32>
    %c0_238 = arith.constant 0 : index
    %c0_239 = arith.constant 0 : index
    %1064 = vector.load %arg10[%c0_238, %c0_239] : memref<8x128xf32, #tpu.memory_space<vmem>>, vector<8x128xf32>
    %1065 = arith.addf %1063, %1064 : vector<8x128xf32>
    %c0_240 = arith.constant 0 : index
    %c0_241 = arith.constant 0 : index
    %1066 = vector.load %arg9[%c0_240, %c0_241] : memref<8x128xf32, #tpu.memory_space<vmem>>, vector<8x128xf32>
    tpu.vector_store %arg9[%c0_240, %c0_241], %1065 {strides = array<i32>} : memref<8x128xf32, #tpu.memory_space<vmem>>, vector<8x128xf32>,
    return
  }
  func.func @transform_0(%arg0: i32, %arg1: memref<8xf32, #tpu.memory_space<smem>>, %arg2: memref<96xi32, #tpu.memory_space<smem>>, %arg3: memref<64xi32, #tpu.memory_space<smem>>, %arg4: memref<64xi32, #tpu.memory_space<smem>>) -> (i32, i32) {
    %c0_i32 = arith.constant 0 : i32
    %c0_i32_0 = arith.constant 0 : i32
    return %arg0, %c0_i32 : i32, i32
  }
  func.func @transform_1(%arg0: i32, %arg1: memref<8xf32, #tpu.memory_space<smem>>, %arg2: memref<96xi32, #tpu.memory_space<smem>>, %arg3: memref<64xi32, #tpu.memory_space<smem>>, %arg4: memref<64xi32, #tpu.memory_space<smem>>) -> (i32, i32) {
    %c0_i32 = arith.constant 0 : i32
    %c0_i32_0 = arith.constant 0 : i32
    %c0_i32_1 = arith.constant 0 : i32
    return %c0_i32, %c0_i32_0 : i32, i32
  }
  func.func @transform_2(%arg0: i32, %arg1: memref<8xf32, #tpu.memory_space<smem>>, %arg2: memref<96xi32, #tpu.memory_space<smem>>, %arg3: memref<64xi32, #tpu.memory_space<smem>>, %arg4: memref<64xi32, #tpu.memory_space<smem>>) -> (i32, i32) {
    %c0_i32 = arith.constant 0 : i32
    %c0_i32_0 = arith.constant 0 : i32
    %c0_i32_1 = arith.constant 0 : i32
    return %c0_i32, %c0_i32_0 : i32, i32
  }
  func.func @transform_3(%arg0: i32, %arg1: memref<8xf32, #tpu.memory_space<smem>>, %arg2: memref<96xi32, #tpu.memory_space<smem>>, %arg3: memref<64xi32, #tpu.memory_space<smem>>, %arg4: memref<64xi32, #tpu.memory_space<smem>>) -> (i32, i32) {
    %c0_i32 = arith.constant 0 : i32
    %c0_i32_0 = arith.constant 0 : i32
    %c0_i32_1 = arith.constant 0 : i32
    return %c0_i32, %c0_i32_0 : i32, i32
  }
  func.func @transform_4(%arg0: i32, %arg1: memref<8xf32, #tpu.memory_space<smem>>, %arg2: memref<96xi32, #tpu.memory_space<smem>>, %arg3: memref<64xi32, #tpu.memory_space<smem>>, %arg4: memref<64xi32, #tpu.memory_space<smem>>) -> (i32, i32) {
    %c0_i32 = arith.constant 0 : i32
    %c0_i32_0 = arith.constant 0 : i32
    return %arg0, %c0_i32 : i32, i32
  }
}

</mosaic_0001>

<llo_original>
// kernel: tpu_custom_call.1
$region0: #{tpu_custom_call.1}
  #allocation0 [shape = 'u32[]', space=smem, size = 0x4, offset = 0x4, fixed_abs, tag = 'smem constant byte address 0x4 - core index']
  #allocation1 [shape = 'u32[72,128]{1,0:T(1,128)}', space=vmem, size = 0x9000, scoped, tag = 'internal scratch']
  #allocation2 [shape = 'f32[8,128]{1,0:T(8,128)}', space=vmem, size = 0x1000, scoped, tag = 'scratch operand']
  #allocation3 [shape = 's32[1]{0}', space=sflag, size = 0x4, scoped, tag = 'scoped memory for tpu_custom_call.1']
  #allocation4 [shape = 'u8[512]{0}', space=smem, size = 0x200, scoped, tag = 'prefetched SMEM operand 0']
  #allocation5 [shape = 'u8[512]{0}', space=smem, size = 0x200, scoped, tag = 'prefetched SMEM operand 1']
  #allocation6 [shape = 'u8[512]{0}', space=smem, size = 0x200, scoped, tag = 'prefetched SMEM operand 2']
  #allocation7 [shape = 'u8[512]{0}', space=smem, size = 0x200, scoped, tag = 'prefetched SMEM operand 3']
  %s0 = inlined_call_operand.hbm [shape: f32[8], index: 0, kind: input, shape index: {}]
  %s1 = inlined_call_operand.hbm [shape: s32[96], index: 1, kind: input, shape index: {}]
  %s2 = inlined_call_operand.vmem [shape: s32[64], index: 2, kind: input, shape index: {}]
  %s3 = inlined_call_operand.vmem [shape: s32[64], index: 3, kind: input, shape index: {}]
  %s4 = inlined_call_operand.hbm [shape: f32[16,128], index: 4, kind: input, shape index: {}]
  %s5 = inlined_call_operand.hbm [shape: f32[16,128], index: 5, kind: input, shape index: {}]
  %s6 = inlined_call_operand.hbm [shape: f32[8,128], index: 6, kind: input, shape index: {}]
  %s7 = inlined_call_operand.hbm [shape: f32[8,128], index: 7, kind: input, shape index: {}]
  %s8 = inlined_call_operand.hbm [shape: f32[16,128], index: 8, kind: output, shape index: {}]
  %s9 = sld [smem:[#allocation0]]
  $region65: #{tpu_custom_call.1} parent=0
    _
  %s11 = ssub.s32 1, %s9
  %s12 = scalar_select 0, %s11, %s9
  %s14 = sshll.u32 %s0, 4
  %s15 = int_to_ptr.hbm [resolvable:$true] %s14
  %17 = dma.hbm_to_smem %s15, 16, [#allocation4], [#allocation3]
  %s19 = sshll.u32 %s1, 4
  %s20 = int_to_ptr.hbm [resolvable:$true] %s19
  %22 = dma.hbm_to_smem %s20, 16, [#allocation5], [#allocation3]
  %s24 = sshll.u32 %s2, 4
  %s25 = int_to_ptr.vmem [resolvable:$true] %s24
  %27 = dma.vmem_to_smem %s25, 16, [#allocation6], [#allocation3]
  %s29 = sshll.u32 %s3, 4
  %s30 = int_to_ptr.vmem [resolvable:$true] %s29
  %32 = dma.vmem_to_smem %s30, 16, [#allocation7], [#allocation3]
  %34 = dma.done [#allocation3], 64
  %35 = sfence
  $region1: #{tpu_custom_call.1} parent=0
    #allocation8 [shape = 'u8[8192]{0}', space=vmem, size = 0x2000, scoped, tag = 'input window, operand 4']
    #allocation9 [shape = 's32[2]{0}', space=sflag, size = 0x8, scoped, tag = 'scoped memory for tpu_custom_call.1']
    #allocation10 [shape = 's32[2]{0}', space=sflag, size = 0x8, scoped, tag = 'scoped memory for tpu_custom_call.1']
    #allocation11 [shape = 'u8[8192]{0}', space=vmem, size = 0x2000, scoped, tag = 'input window, operand 5, single buffered']
    #allocation12 [shape = 's32[1]{0}', space=sflag, size = 0x4, scoped, tag = 'scoped memory for tpu_custom_call.1']
    #allocation13 [shape = 'u8[4096]{0}', space=vmem, size = 0x1000, scoped, tag = 'input window, operand 6, single buffered']
    #allocation14 [shape = 'u8[4096]{0}', space=vmem, size = 0x1000, scoped, tag = 'input window, operand 7, single buffered']
    #allocation15 [shape = 's32[1]{0}', space=sflag, size = 0x4, scoped, tag = 'scoped memory for tpu_custom_call.1']
    #allocation16 [shape = 'u8[8192]{0}', space=vmem, size = 0x2000, scoped, tag = 'output window, operand 0']
    %36 = vsyncpa [#allocation9], 0
    %s37 = scalar_lea.sflag [#allocation9], 1
    %38 = vsyncpa %s37, 0
    %39 = vsyncpa [#allocation12], 0
    %40 = vsyncpa [#allocation15], 0
    %41 = vsyncpa [#allocation10], 0
    %s42 = scalar_lea.sflag [#allocation10], 1
    %43 = vsyncpa %s42, 0
    loop: start=0, step=1, limit=4
    $region2: #{tpu_custom_call.1} parent=1 // loop_pre_header
      _
    $region3: #{tpu_custom_call.1} parent=1 // loop_header
      %s45 = sphi 0, %s49
      %p46 = scmp.ge.s32.totalorder %s45, 4
      %s55 = sphi 0, %s57
      %s58 = sphi 0, %s55
      %s59 = sphi 0, %s58
      %s75 = sphi 0, %s59
      %s79 = sphi 0, %s79
      %s81 = sphi 0, %s79
      %s82 = sphi 0, %s81
      %s96 = sphi 0, %s82
      %s100 = sphi 0, %s100
      %s102 = sphi 0, %s100
      %s103 = sphi 0, %s102
      %s117 = sphi 0, %s103
      %s121 = sphi 0, %s121
      %s123 = sphi 0, %s121
      %s124 = sphi 0, %s123
      %s138 = sphi 0, %s124
      %s144 = sphi 0, %s146
      %s147 = sphi 0, %s144
      %s148 = sphi 0, %s147
      %s164 = sphi 0, %s148
    $region4: #{tpu_custom_call.1} parent=1 // loop_header_branch
      %48 = sbr.rel (%p46) target = $region8
    $region5: #{tpu_custom_call.1} parent=1 // loop_body
      %s50 = ssub.s32 %s45, 1
      %s51 = ssub.s32 %s45, 2
      %s52 = sadd.s32 %s45, 1
      %s53 = ssub.s32 %s45, %s52
      %p54 = scmp.eq.s32.totalorder %s53, 0
      %s56 = sadd.s32 %s55, 1
      %s57 = scalar_select %p54, %s55, %s56
      %p60 = pneg %p54
      %p61 = scmp.eq.s32.totalorder %s45, 1
      %p62 = por %p60, %p61
      %p63 = scmp.ne.s32.totalorder %s55, %s58
      %p64 = scmp.eq.s32.totalorder %s45, 0
      %p65 = por %p63, %p64
      %p66 = scmp.ne.s32.totalorder %s55, %s58
      %p67 = scmp.eq.s32.totalorder %s50, 1
      %p68 = por %p66, %p67
      %p69 = scmp.ne.s32.totalorder %s58, %s59
      %p70 = scmp.eq.s32.totalorder %s50, 0
      %p71 = por %p69, %p70
      %p72 = scmp.ne.s32.totalorder %s58, %s59
      %p73 = scmp.eq.s32.totalorder %s51, 1
      %p74 = por %p72, %p73
      %p76 = scmp.ne.s32.totalorder %s59, %s75
      %p77 = scmp.eq.s32.totalorder %s51, 0
      %p78 = por %p76, %p77
      %s80 = sadd.s32 %s79, 1
      %p83 = scmp.eq.s32.totalorder %s45, 1
      %p84 = scmp.ne.s32.totalorder %s79, %s81
      %p85 = scmp.eq.s32.totalorder %s45, 0
      %p86 = por %p84, %p85
      %p87 = scmp.ne.s32.totalorder %s79, %s81
      %p88 = scmp.eq.s32.totalorder %s50, 1
      %p89 = por %p87, %p88
      %p90 = scmp.ne.s32.totalorder %s81, %s82
      %p91 = scmp.eq.s32.totalorder %s50, 0
      %p92 = por %p90, %p91
      %p93 = scmp.ne.s32.totalorder %s81, %s82
      %p94 = scmp.eq.s32.totalorder %s51, 1
      %p95 = por %p93, %p94
      %p97 = scmp.ne.s32.totalorder %s82, %s96
      %p98 = scmp.eq.s32.totalorder %s51, 0
      %p99 = por %p97, %p98
      %s101 = sadd.s32 %s100, 1
      %p104 = scmp.eq.s32.totalorder %s45, 1
      %p105 = scmp.ne.s32.totalorder %s100, %s102
      %p106 = scmp.eq.s32.totalorder %s45, 0
      %p107 = por %p105, %p106
      %p108 = scmp.ne.s32.totalorder %s100, %s102
      %p109 = scmp.eq.s32.totalorder %s50, 1
      %p110 = por %p108, %p109
      %p111 = scmp.ne.s32.totalorder %s102, %s103
      %p112 = scmp.eq.s32.totalorder %s50, 0
      %p113 = por %p111, %p112
      %p114 = scmp.ne.s32.totalorder %s102, %s103
      %p115 = scmp.eq.s32.totalorder %s51, 1
      %p116 = por %p114, %p115
      %p118 = scmp.ne.s32.totalorder %s103, %s117
      %p119 = scmp.eq.s32.totalorder %s51, 0
      %p120 = por %p118, %p119
      %s122 = sadd.s32 %s121, 1
      %p125 = scmp.eq.s32.totalorder %s45, 1
      %p126 = scmp.ne.s32.totalorder %s121, %s123
      %p127 = scmp.eq.s32.totalorder %s45, 0
      %p128 = por %p126, %p127
      %p129 = scmp.ne.s32.totalorder %s121, %s123
      %p130 = scmp.eq.s32.totalorder %s50, 1
      %p131 = por %p129, %p130
      %p132 = scmp.ne.s32.totalorder %s123, %s124
      %p133 = scmp.eq.s32.totalorder %s50, 0
      %p134 = por %p132, %p133
      %p135 = scmp.ne.s32.totalorder %s123, %s124
      %p136 = scmp.eq.s32.totalorder %s51, 1
      %p137 = por %p135, %p136
      %p139 = scmp.ne.s32.totalorder %s124, %s138
      %p140 = scmp.eq.s32.totalorder %s51, 0
      %p141 = por %p139, %p140
      %s142 = ssub.s32 %s45, %s52
      %p143 = scmp.eq.s32.totalorder %s142, 0
      %s145 = sadd.s32 %s144, 1
      %s146 = scalar_select %p143, %s144, %s145
      %p149 = pneg %p143
      %p150 = scmp.eq.s32.totalorder %s45, 1
      %p151 = por %p149, %p150
      %p152 = scmp.ne.s32.totalorder %s144, %s147
      %p153 = scmp.eq.s32.totalorder %s45, 0
      %p154 = por %p152, %p153
      %p155 = scmp.ne.s32.totalorder %s144, %s147
      %p156 = scmp.eq.s32.totalorder %s50, 1
      %p157 = por %p155, %p156
      %p158 = scmp.ne.s32.totalorder %s147, %s148
      %p159 = scmp.eq.s32.totalorder %s50, 0
      %p160 = por %p158, %p159
      %p161 = scmp.ne.s32.totalorder %s147, %s148
      %p162 = scmp.eq.s32.totalorder %s51, 1
      %p163 = por %p161, %p162
      %p165 = scmp.ne.s32.totalorder %s148, %s164
      %p166 = scmp.eq.s32.totalorder %s51, 0
      %p167 = por %p165, %p166
      %p168 = scmp.le.s32.totalorder 1, %s45
      %p169 = scmp.lt.s32.totalorder %s45, 3
      %p170 = pnand %p168, %p169
      %p171 = pneg %p170
      // Predicated region
      $region9: #{tpu_custom_call.1} parent=5 // pred_check
        _
      $region10: #{tpu_custom_call.1} parent=5 // pred_check_branch
        %173 = sbr.rel (%p170) target = $region12
      $region11: #{tpu_custom_call.1} parent=5 // pred_region
        %s174 = ssub.s32 %s45, 1
        // Predicated region
        $region13: #{tpu_custom_call.1} parent=11 // pred_check
          %p175 = pneg %p92
        $region14: #{tpu_custom_call.1} parent=11 // pred_check_branch
          %177 = sbr.rel (%p175) target = $region16
        $region15: #{tpu_custom_call.1} parent=11 // pred_region
          %179 = vsyncadd [#allocation12], 0
          %s180 = sshll.u32 %s5, 4
          %s181 = int_to_ptr.hbm [resolvable:$true] %s180
          %s182 = sshll.u32 [#allocation11], 4
          %s183 = int_to_ptr.vmem [resolvable:$true] %s182
          %188 = dma.hbm_to_vmem [thread:$0]  %s181, 256, %s183, [#allocation12], 128, 128, 8
        $region16: #{tpu_custom_call.1} parent=11 // pred_fallthru
          _
        // Predicated region
        $region17: #{tpu_custom_call.1} parent=11 // pred_check
          %p189 = pneg %p113
        $region18: #{tpu_custom_call.1} parent=11 // pred_check_branch
          %191 = sbr.rel (%p189) target = $region20
        $region19: #{tpu_custom_call.1} parent=11 // pred_region
          %193 = vsyncadd [#allocation12], 0
          %s195 = sshll.u32 %s6, 4
          %s196 = int_to_ptr.hbm [resolvable:$true] %s195
          %s197 = sshll.u32 [#allocation13], 4
          %s198 = int_to_ptr.vmem [resolvable:$true] %s197
          %200 = dma.hbm_to_vmem [thread:$0]  %s196, 128, %s198, [#allocation12]
        $region20: #{tpu_custom_call.1} parent=11 // pred_fallthru
          _
        // Predicated region
        $region21: #{tpu_custom_call.1} parent=11 // pred_check
          %p201 = pneg %p134
        $region22: #{tpu_custom_call.1} parent=11 // pred_check_branch
          %203 = sbr.rel (%p201) target = $region24
        $region23: #{tpu_custom_call.1} parent=11 // pred_region
          %205 = vsyncadd [#allocation15], 0
          %s207 = sshll.u32 %s7, 4
          %s208 = int_to_ptr.hbm [resolvable:$true] %s207
          %s209 = sshll.u32 [#allocation14], 4
          %s210 = int_to_ptr.vmem [resolvable:$true] %s209
          %212 = dma.hbm_to_vmem [thread:$0]  %s208, 128, %s210, [#allocation15]
        $region24: #{tpu_custom_call.1} parent=11 // pred_fallthru
          _
      $region12: #{tpu_custom_call.1} parent=5 // pred_fallthru
        _
      %p213 = scmp.lt.s32.totalorder %s45, 2
      // Predicated region
      $region25: #{tpu_custom_call.1} parent=5 // pred_check
        %p214 = pneg %p213
      $region26: #{tpu_custom_call.1} parent=5 // pred_check_branch
        %216 = sbr.rel (%p214) target = $region28
      $region27: #{tpu_custom_call.1} parent=5 // pred_region
        // Predicated region
        $region29: #{tpu_custom_call.1} parent=27 // pred_check
          %p217 = pneg %p65
        $region30: #{tpu_custom_call.1} parent=27 // pred_check_branch
          %219 = sbr.rel (%p217) target = $region32
        $region31: #{tpu_custom_call.1} parent=27 // pred_region
          %s220 = sand.u32 %s55, 1
          %s221 = scalar_lea.sflag [#allocation9], %s220
          %s222 = sand.u32 %s55, 1
          %s223 = smul.addr %s222, 8
          %s224 = scalar_lea.vmem [#allocation8], %s223
          %226 = vsyncadd %s221, 0
          %s227 = smul.addr %s45, 8
          %s228 = scalar_lea.hbm %s4, %s227
          %s230 = sshll.u32 %s228, 4
          %s231 = int_to_ptr.hbm [resolvable:$true] %s230
          %s232 = sshll.u32 %s224, 4
          %s233 = int_to_ptr.vmem [resolvable:$true] %s232
          %235 = dma.hbm_to_vmem [thread:$0]  %s231, 128, %s233, %s221
        $region32: #{tpu_custom_call.1} parent=27 // pred_fallthru
          _
      $region28: #{tpu_custom_call.1} parent=5 // pred_fallthru
        _
      %p236 = scmp.le.s32.totalorder 1, %s45
      %p237 = scmp.lt.s32.totalorder %s45, 3
      %p238 = pnand %p236, %p237
      %p239 = pneg %p238
      // Predicated region
      $region33: #{tpu_custom_call.1} parent=5 // pred_check
        _
      $region34: #{tpu_custom_call.1} parent=5 // pred_check_branch
        %241 = sbr.rel (%p238) target = $region36
      $region35: #{tpu_custom_call.1} parent=5 // pred_region
        %s242 = ssub.s32 %s45, 1
        %s243 = sand.u32 %s58, 1
        %s244 = scalar_lea.sflag [#allocation9], %s243
        %s245 = sand.u32 %s58, 1
        %s246 = smul.addr %s245, 8
        %s247 = scalar_lea.vmem [#allocation8], %s246
        // Predicated region
        $region37: #{tpu_custom_call.1} parent=35 // pred_check
          %p248 = pneg %p71
        $region38: #{tpu_custom_call.1} parent=35 // pred_check_branch
          %250 = sbr.rel (%p248) target = $region40
        $region39: #{tpu_custom_call.1} parent=35 // pred_region
          %252 = dma.done %s244, 128
        $region40: #{tpu_custom_call.1} parent=35 // pred_fallthru
          _
        // Predicated region
        $region41: #{tpu_custom_call.1} parent=35 // pred_check
          %p253 = pneg %p92
        $region42: #{tpu_custom_call.1} parent=35 // pred_check_branch
          %255 = sbr.rel (%p253) target = $region44
        $region43: #{tpu_custom_call.1} parent=35 // pred_region
          %257 = dma.done [#allocation12], 256
        $region44: #{tpu_custom_call.1} parent=35 // pred_fallthru
          _
        // Predicated region
        $region45: #{tpu_custom_call.1} parent=35 // pred_check
          %p258 = pneg %p113
        $region46: #{tpu_custom_call.1} parent=35 // pred_check_branch
          %260 = sbr.rel (%p258) target = $region48
        $region47: #{tpu_custom_call.1} parent=35 // pred_region
          %262 = dma.done [#allocation12], 128
        $region48: #{tpu_custom_call.1} parent=35 // pred_fallthru
          _
        // Predicated region
        $region49: #{tpu_custom_call.1} parent=35 // pred_check
          %p263 = pneg %p134
        $region50: #{tpu_custom_call.1} parent=35 // pred_check_branch
          %265 = sbr.rel (%p263) target = $region52
        $region51: #{tpu_custom_call.1} parent=35 // pred_region
          %267 = dma.done [#allocation15], 128
        $region52: #{tpu_custom_call.1} parent=35 // pred_fallthru
          _
        %s268 = sand.u32 %s58, 1
        %s269 = scalar_lea.sflag [#allocation9], %s268
        %s270 = sand.u32 %s58, 1
        %s271 = smul.addr %s270, 8
        %s272 = scalar_lea.vmem [#allocation8], %s271
        %p273 = pneg %p71
        %p274 = pneg %p68
        %p275 = pneg %p92
        %p276 = pneg %p89
        %p277 = pneg %p113
        %p278 = pneg %p110
        %p279 = pneg %p134
        %p280 = pneg %p131
        %p281 = pneg %p160
        %p282 = pneg %p157
        %s283 = sand.u32 %s147, 1
        %s284 = scalar_lea.sflag [#allocation10], %s283
        %s285 = sand.u32 %s147, 1
        %s286 = smul.addr %s285, 8
        %s287 = scalar_lea.vmem [#allocation16], %s286
        %s288 = smul.u32 %s50, 8
        %s289 = sld [smem:[#allocation4]]
        %s290 = sld [smem:[#allocation4 + $0x1]]
        %s291 = sld [smem:[#allocation4 + $0x2]]
        %s292 = sld [smem:[#allocation4 + $0x3]]
        %s293 = sld [smem:[#allocation4 + $0x4]]
        %s294 = sld [smem:[#allocation4 + $0x5]]
        %s295 = sld [smem:[#allocation4 + $0x6]]
        %s296 = sld [smem:[#allocation4 + $0x7]]
        %v297 = vld [vmem:[#allocation11] sm:$0xff]
        %v298 = vld [vmem:[#allocation11 + $0x8] sm:$0xff]
        %v299 = vld [vmem:[#allocation13] sm:$0xff]
        %v300 = vld [vmem:[#allocation14] sm:$0xff]
        %v301 = vlaneseq
        %v302 = vshrl.u32 %v301, 7
        %v303 = vadd.s32 %v302, 8
        %s304 = smul.u32 %s50, 48
        %s305 = sld [smem:[#allocation5 + %s304]]
        %v306 = vstv %s305
        %vm307 = vcmp.eq.s32.totalorder %v302, %v306
        %vm308 = vcmp.eq.s32.totalorder %v303, %v306
        %s309 = sadd.s32 %s304, 1
        %s310 = sld [smem:[#allocation5 + %s309]]
        %v311 = vstv %s310
        %vm312 = vcmp.eq.s32.totalorder %v302, %v311
        %vm313 = vcmp.eq.s32.totalorder %v303, %v311
        %vm314 = vmor %vm307, %vm312
        %vm315 = vmor %vm308, %vm313
        %s316 = sadd.s32 %s304, 2
        %s317 = sld [smem:[#allocation5 + %s316]]
        %v318 = vstv %s317
        %vm319 = vcmp.eq.s32.totalorder %v302, %v318
        %vm320 = vcmp.eq.s32.totalorder %v303, %v318
        %vm321 = vmor %vm314, %vm319
        %vm322 = vmor %vm315, %vm320
        %s323 = sadd.s32 %s304, 3
        %s324 = sld [smem:[#allocation5 + %s323]]
        %v325 = vstv %s324
        %vm326 = vcmp.eq.s32.totalorder %v302, %v325
        %vm327 = vcmp.eq.s32.totalorder %v303, %v325
        %vm328 = vmor %vm321, %vm326
        %vm329 = vmor %vm322, %vm327
        %s330 = sadd.s32 %s304, 4
        %s331 = sld [smem:[#allocation5 + %s330]]
        %v332 = vstv %s331
        %vm333 = vcmp.eq.s32.totalorder %v302, %v332
        %vm334 = vcmp.eq.s32.totalorder %v303, %v332
        %vm335 = vmor %vm328, %vm333
        %vm336 = vmor %vm329, %vm334
        %s337 = sadd.s32 %s304, 5
        %s338 = sld [smem:[#allocation5 + %s337]]
        %v339 = vstv %s338
        %vm340 = vcmp.eq.s32.totalorder %v302, %v339
        %vm341 = vcmp.eq.s32.totalorder %v303, %v339
        %vm342 = vmor %vm335, %vm340
        %vm343 = vmor %vm336, %vm341
        %v344 = vsel %vm342, 1, 0
        %v345 = vsel %vm343, 1, 0
        %vm346 = vcmp.eq.s32.totalorder %v344, 1
        %vm347 = vcmp.eq.s32.totalorder %v345, 1
        %v348 = vsel %vm346, %v297, 0.0
        %v349 = vsel %vm347, %v298, 0.0
        %v350 = vmax.f32 %v348, %v349
        %v351 = vrot.slane %v350, 4
        %v352 = vmax.f32 %v350, %v351
        %v353 = vrot.slane %v352, 2
        %v354 = vmax.f32 %v352, %v353
        %v355 = vrot.slane %v354, 1
        %v356 = vmax.f32 %v354, %v355
        %s357 = smul.u32 %s50, 32
        %s358 = sld [smem:[#allocation6 + %s357]]
        %v359 = vstv %s358
        %vm360 = vcmp.eq.s32.totalorder %v302, %v359
        %s361 = sadd.s32 %s357, 1
        %s362 = sld [smem:[#allocation6 + %s361]]
        %v363 = vstv %s362
        %vm364 = vcmp.eq.s32.totalorder %v302, %v363
        %vm365 = vmor %vm360, %vm364
        %s366 = sadd.s32 %s357, 2
        %s367 = sld [smem:[#allocation6 + %s366]]
        %v368 = vstv %s367
        %vm369 = vcmp.eq.s32.totalorder %v302, %v368
        %vm370 = vmor %vm365, %vm369
        %s371 = sadd.s32 %s357, 3
        %s372 = sld [smem:[#allocation6 + %s371]]
        %v373 = vstv %s372
        %vm374 = vcmp.eq.s32.totalorder %v302, %v373
        %vm375 = vmor %vm370, %vm374
        %v376 = vsel %vm375, 1, 0
        %vm377 = vcmp.eq.s32.totalorder %v376, 1
        %v378 = vsel %vm377, %v299, 0.0
        %v379 = vrot.slane %v378, 4
        %v380 = vmax.f32 %v378, %v379
        %v381 = vrot.slane %v380, 2
        %v382 = vmax.f32 %v380, %v381
        %v383 = vrot.slane %v382, 1
        %v384 = vmax.f32 %v382, %v383
        %s385 = sld [smem:[#allocation7 + %s357]]
        %v386 = vstv %s385
        %vm387 = vcmp.eq.s32.totalorder %v302, %v386
        %s388 = sld [smem:[#allocation7 + %s361]]
        %v389 = vstv %s388
        %vm390 = vcmp.eq.s32.totalorder %v302, %v389
        %vm391 = vmor %vm387, %vm390
        %s392 = sld [smem:[#allocation7 + %s366]]
        %v393 = vstv %s392
        %vm394 = vcmp.eq.s32.totalorder %v302, %v393
        %vm395 = vmor %vm391, %vm394
        %s396 = sld [smem:[#allocation7 + %s371]]
        %v397 = vstv %s396
        %vm398 = vcmp.eq.s32.totalorder %v302, %v397
        %vm399 = vmor %vm395, %vm398
        %v400 = vsel %vm399, 1, 0
        %vm401 = vcmp.eq.s32.totalorder %v400, 1
        %v402 = vsel %vm401, %v300, 0.0
        %v403 = vrot.slane %v402, 4
        %v404 = vmax.f32 %v402, %v403
        %v405 = vrot.slane %v404, 2
        %v406 = vmax.f32 %v404, %v405
        %v407 = vrot.slane %v406, 1
        %v408 = vmax.f32 %v406, %v407
        %v409 = vstv %s289
        %vm410 = vcmp.lt.f32.partialorder %v356, %v409
        %v411 = vstv %s290
        %vm412 = vcmp.lt.f32.partialorder %v384, %v411
        %vm413 = vmand %vm410, %vm412
        %v414 = vstv %s291
        %vm415 = vcmp.lt.f32.partialorder %v408, %v414
        %vm416 = vmand %vm413, %vm415
        %v417 = vstv %s292
        %vm418 = vcmp.gt.f32.partialorder %v356, %v417
        %v419 = vstv %s293
        %vm420 = vcmp.gt.f32.partialorder %v384, %v419
        %vm421 = vmor %vm418, %vm420
        %v422 = vstv %s294
        %vm423 = vcmp.gt.f32.partialorder %v408, %v422
        %vm424 = vmor %vm421, %vm423
        %v425 = vstv %s296
        %v426 = vsel %vm424, %v425, 0.0
        %v427 = vstv %s295
        %v428 = vsel %vm416, %v427, %v426
        %429 = vst [vmem:[#allocation2] sm:$0x1] %v428
        %s430 = sadd.s32 %s288, 1
        %s431 = smul.u32 %s430, 6
        %s432 = sld [smem:[#allocation5 + %s431]]
        %v433 = vstv %s432
        %vm434 = vcmp.eq.s32.totalorder %v302, %v433
        %vm435 = vcmp.eq.s32.totalorder %v303, %v433
        %s436 = sadd.s32 %s431, 1
        %s437 = sld [smem:[#allocation5 + %s436]]
        %v438 = vstv %s437
        %vm439 = vcmp.eq.s32.totalorder %v302, %v438
        %vm440 = vcmp.eq.s32.totalorder %v303, %v438
        %vm441 = vmor %vm434, %vm439
        %vm442 = vmor %vm435, %vm440
        %s443 = sadd.s32 %s431, 2
        %s444 = sld [smem:[#allocation5 + %s443]]
        %v445 = vstv %s444
        %vm446 = vcmp.eq.s32.totalorder %v302, %v445
        %vm447 = vcmp.eq.s32.totalorder %v303, %v445
        %vm448 = vmor %vm441, %vm446
        %vm449 = vmor %vm442, %vm447
        %s450 = sadd.s32 %s431, 3
        %s451 = sld [smem:[#allocation5 + %s450]]
        %v452 = vstv %s451
        %vm453 = vcmp.eq.s32.totalorder %v302, %v452
        %vm454 = vcmp.eq.s32.totalorder %v303, %v452
        %vm455 = vmor %vm448, %vm453
        %vm456 = vmor %vm449, %vm454
        %s457 = sadd.s32 %s431, 4
        %s458 = sld [smem:[#allocation5 + %s457]]
        %v459 = vstv %s458
        %vm460 = vcmp.eq.s32.totalorder %v302, %v459
        %vm461 = vcmp.eq.s32.totalorder %v303, %v459
        %vm462 = vmor %vm455, %vm460
        %vm463 = vmor %vm456, %vm461
        %s464 = sadd.s32 %s431, 5
        %s465 = sld [smem:[#allocation5 + %s464]]
        %v466 = vstv %s465
        %vm467 = vcmp.eq.s32.totalorder %v302, %v466
        %vm468 = vcmp.eq.s32.totalorder %v303, %v466
        %vm469 = vmor %vm462, %vm467
        %vm470 = vmor %vm463, %vm468
        %v471 = vsel %vm469, 1, 0
        %v472 = vsel %vm470, 1, 0
        %vm473 = vcmp.eq.s32.totalorder %v471, 1
        %vm474 = vcmp.eq.s32.totalorder %v472, 1
        %v475 = vsel %vm473, %v297, 0.0
        %v476 = vsel %vm474, %v298, 0.0
        %v477 = vmax.f32 %v475, %v476
        %v478 = vrot.slane %v477, 4
        %v479 = vmax.f32 %v477, %v478
        %v480 = vrot.slane %v479, 2
        %v481 = vmax.f32 %v479, %v480
        %v482 = vrot.slane %v481, 1
        %v483 = vmax.f32 %v481, %v482
        %s484 = smul.u32 %s430, 4
        %s485 = sld [smem:[#allocation6 + %s484]]
        %v486 = vstv %s485
        %vm487 = vcmp.eq.s32.totalorder %v302, %v486
        %s488 = sadd.s32 %s484, 1
        %s489 = sld [smem:[#allocation6 + %s488]]
        %v490 = vstv %s489
        %vm491 = vcmp.eq.s32.totalorder %v302, %v490
        %vm492 = vmor %vm487, %vm491
        %s493 = sadd.s32 %s484, 2
        %s494 = sld [smem:[#allocation6 + %s493]]
        %v495 = vstv %s494
        %vm496 = vcmp.eq.s32.totalorder %v302, %v495
        %vm497 = vmor %vm492, %vm496
        %s498 = sadd.s32 %s484, 3
        %s499 = sld [smem:[#allocation6 + %s498]]
        %v500 = vstv %s499
        %vm501 = vcmp.eq.s32.totalorder %v302, %v500
        %vm502 = vmor %vm497, %vm501
        %v503 = vsel %vm502, 1, 0
        %vm504 = vcmp.eq.s32.totalorder %v503, 1
        %v505 = vsel %vm504, %v299, 0.0
        %v506 = vrot.slane %v505, 4
        %v507 = vmax.f32 %v505, %v506
        %v508 = vrot.slane %v507, 2
        %v509 = vmax.f32 %v507, %v508
        %v510 = vrot.slane %v509, 1
        %v511 = vmax.f32 %v509, %v510
        %s512 = sld [smem:[#allocation7 + %s484]]
        %v513 = vstv %s512
        %vm514 = vcmp.eq.s32.totalorder %v302, %v513
        %s515 = sld [smem:[#allocation7 + %s488]]
        %v516 = vstv %s515
        %vm517 = vcmp.eq.s32.totalorder %v302, %v516
        %vm518 = vmor %vm514, %vm517
        %s519 = sld [smem:[#allocation7 + %s493]]
        %v520 = vstv %s519
        %vm521 = vcmp.eq.s32.totalorder %v302, %v520
        %vm522 = vmor %vm518, %vm521
        %s523 = sld [smem:[#allocation7 + %s498]]
        %v524 = vstv %s523
        %vm525 = vcmp.eq.s32.totalorder %v302, %v524
        %vm526 = vmor %vm522, %vm525
        %v527 = vsel %vm526, 1, 0
        %vm528 = vcmp.eq.s32.totalorder %v527, 1
        %v529 = vsel %vm528, %v300, 0.0
        %v530 = vrot.slane %v529, 4
        %v531 = vmax.f32 %v529, %v530
        %v532 = vrot.slane %v531, 2
        %v533 = vmax.f32 %v531, %v532
        %v534 = vrot.slane %v533, 1
        %v535 = vmax.f32 %v533, %v534
        %vm536 = vcmp.lt.f32.partialorder %v483, %v409
        %vm537 = vcmp.lt.f32.partialorder %v511, %v411
        %vm538 = vmand %vm536, %vm537
        %vm539 = vcmp.lt.f32.partialorder %v535, %v414
        %vm540 = vmand %vm538, %vm539
        %vm541 = vcmp.gt.f32.partialorder %v483, %v417
        %vm542 = vcmp.gt.f32.partialorder %v511, %v419
        %vm543 = vmor %vm541, %vm542
        %vm544 = vcmp.gt.f32.partialorder %v535, %v422
        %vm545 = vmor %vm543, %vm544
        %v546 = vsel %vm545, %v425, 0.0
        %v547 = vsel %vm540, %v427, %v546
        %548 = vst [vmem:[#allocation2 + $0x1] sm:$0x1] %v547
        %s549 = sadd.s32 %s288, 2
        %s550 = smul.u32 %s549, 6
        %s551 = sld [smem:[#allocation5 + %s550]]
        %v552 = vstv %s551
        %vm553 = vcmp.eq.s32.totalorder %v302, %v552
        %vm554 = vcmp.eq.s32.totalorder %v303, %v552
        %s555 = sadd.s32 %s550, 1
        %s556 = sld [smem:[#allocation5 + %s555]]
        %v557 = vstv %s556
        %vm558 = vcmp.eq.s32.totalorder %v302, %v557
        %vm559 = vcmp.eq.s32.totalorder %v303, %v557
        %vm560 = vmor %vm553, %vm558
        %vm561 = vmor %vm554, %vm559
        %s562 = sadd.s32 %s550, 2
        %s563 = sld [smem:[#allocation5 + %s562]]
        %v564 = vstv %s563
        %vm565 = vcmp.eq.s32.totalorder %v302, %v564
        %vm566 = vcmp.eq.s32.totalorder %v303, %v564
        %vm567 = vmor %vm560, %vm565
        %vm568 = vmor %vm561, %vm566
        %s569 = sadd.s32 %s550, 3
        %s570 = sld [smem:[#allocation5 + %s569]]
        %v571 = vstv %s570
        %vm572 = vcmp.eq.s32.totalorder %v302, %v571
        %vm573 = vcmp.eq.s32.totalorder %v303, %v571
        %vm574 = vmor %vm567, %vm572
        %vm575 = vmor %vm568, %vm573
        %s576 = sadd.s32 %s550, 4
        %s577 = sld [smem:[#allocation5 + %s576]]
        %v578 = vstv %s577
        %vm579 = vcmp.eq.s32.totalorder %v302, %v578
        %vm580 = vcmp.eq.s32.totalorder %v303, %v578
        %vm581 = vmor %vm574, %vm579
        %vm582 = vmor %vm575, %vm580
        %s583 = sadd.s32 %s550, 5
        %s584 = sld [smem:[#allocation5 + %s583]]
        %v585 = vstv %s584
        %vm586 = vcmp.eq.s32.totalorder %v302, %v585
        %vm587 = vcmp.eq.s32.totalorder %v303, %v585
        %vm588 = vmor %vm581, %vm586
        %vm589 = vmor %vm582, %vm587
        %v590 = vsel %vm588, 1, 0
        %v591 = vsel %vm589, 1, 0
        %vm592 = vcmp.eq.s32.totalorder %v590, 1
        %vm593 = vcmp.eq.s32.totalorder %v591, 1
        %v594 = vsel %vm592, %v297, 0.0
        %v595 = vsel %vm593, %v298, 0.0
        %v596 = vmax.f32 %v594, %v595
        %v597 = vrot.slane %v596, 4
        %v598 = vmax.f32 %v596, %v597
        %v599 = vrot.slane %v598, 2
        %v600 = vmax.f32 %v598, %v599
        %v601 = vrot.slane %v600, 1
        %v602 = vmax.f32 %v600, %v601
        %s603 = smul.u32 %s549, 4
        %s604 = sld [smem:[#allocation6 + %s603]]
        %v605 = vstv %s604
        %vm606 = vcmp.eq.s32.totalorder %v302, %v605
        %s607 = sadd.s32 %s603, 1
        %s608 = sld [smem:[#allocation6 + %s607]]
        %v609 = vstv %s608
        %vm610 = vcmp.eq.s32.totalorder %v302, %v609
        %vm611 = vmor %vm606, %vm610
        %s612 = sadd.s32 %s603, 2
        %s613 = sld [smem:[#allocation6 + %s612]]
        %v614 = vstv %s613
        %vm615 = vcmp.eq.s32.totalorder %v302, %v614
        %vm616 = vmor %vm611, %vm615
        %s617 = sadd.s32 %s603, 3
        %s618 = sld [smem:[#allocation6 + %s617]]
        %v619 = vstv %s618
        %vm620 = vcmp.eq.s32.totalorder %v302, %v619
        %vm621 = vmor %vm616, %vm620
        %v622 = vsel %vm621, 1, 0
        %vm623 = vcmp.eq.s32.totalorder %v622, 1
        %v624 = vsel %vm623, %v299, 0.0
        %v625 = vrot.slane %v624, 4
        %v626 = vmax.f32 %v624, %v625
        %v627 = vrot.slane %v626, 2
        %v628 = vmax.f32 %v626, %v627
        %v629 = vrot.slane %v628, 1
        %v630 = vmax.f32 %v628, %v629
        %s631 = sld [smem:[#allocation7 + %s603]]
        %v632 = vstv %s631
        %vm633 = vcmp.eq.s32.totalorder %v302, %v632
        %s634 = sld [smem:[#allocation7 + %s607]]
        %v635 = vstv %s634
        %vm636 = vcmp.eq.s32.totalorder %v302, %v635
        %vm637 = vmor %vm633, %vm636
        %s638 = sld [smem:[#allocation7 + %s612]]
        %v639 = vstv %s638
        %vm640 = vcmp.eq.s32.totalorder %v302, %v639
        %vm641 = vmor %vm637, %vm640
        %s642 = sld [smem:[#allocation7 + %s617]]
        %v643 = vstv %s642
        %vm644 = vcmp.eq.s32.totalorder %v302, %v643
        %vm645 = vmor %vm641, %vm644
        %v646 = vsel %vm645, 1, 0
        %vm647 = vcmp.eq.s32.totalorder %v646, 1
        %v648 = vsel %vm647, %v300, 0.0
        %v649 = vrot.slane %v648, 4
        %v650 = vmax.f32 %v648, %v649
        %v651 = vrot.slane %v650, 2
        %v652 = vmax.f32 %v650, %v651
        %v653 = vrot.slane %v652, 1
        %v654 = vmax.f32 %v652, %v653
        %vm655 = vcmp.lt.f32.partialorder %v602, %v409
        %vm656 = vcmp.lt.f32.partialorder %v630, %v411
        %vm657 = vmand %vm655, %vm656
        %vm658 = vcmp.lt.f32.partialorder %v654, %v414
        %vm659 = vmand %vm657, %vm658
        %vm660 = vcmp.gt.f32.partialorder %v602, %v417
        %vm661 = vcmp.gt.f32.partialorder %v630, %v419
        %vm662 = vmor %vm660, %vm661
        %vm663 = vcmp.gt.f32.partialorder %v654, %v422
        %vm664 = vmor %vm662, %vm663
        %v665 = vsel %vm664, %v425, 0.0
        %v666 = vsel %vm659, %v427, %v665
        %667 = vst [vmem:[#allocation2 + $0x2] sm:$0x1] %v666
        %s668 = sadd.s32 %s288, 3
        %s669 = smul.u32 %s668, 6
        %s670 = sld [smem:[#allocation5 + %s669]]
        %v671 = vstv %s670
        %vm672 = vcmp.eq.s32.totalorder %v302, %v671
        %vm673 = vcmp.eq.s32.totalorder %v303, %v671
        %s674 = sadd.s32 %s669, 1
        %s675 = sld [smem:[#allocation5 + %s674]]
        %v676 = vstv %s675
        %vm677 = vcmp.eq.s32.totalorder %v302, %v676
        %vm678 = vcmp.eq.s32.totalorder %v303, %v676
        %vm679 = vmor %vm672, %vm677
        %vm680 = vmor %vm673, %vm678
        %s681 = sadd.s32 %s669, 2
        %s682 = sld [smem:[#allocation5 + %s681]]
        %v683 = vstv %s682
        %vm684 = vcmp.eq.s32.totalorder %v302, %v683
        %vm685 = vcmp.eq.s32.totalorder %v303, %v683
        %vm686 = vmor %vm679, %vm684
        %vm687 = vmor %vm680, %vm685
        %s688 = sadd.s32 %s669, 3
        %s689 = sld [smem:[#allocation5 + %s688]]
        %v690 = vstv %s689
        %vm691 = vcmp.eq.s32.totalorder %v302, %v690
        %vm692 = vcmp.eq.s32.totalorder %v303, %v690
        %vm693 = vmor %vm686, %vm691
        %vm694 = vmor %vm687, %vm692
        %s695 = sadd.s32 %s669, 4
        %s696 = sld [smem:[#allocation5 + %s695]]
        %v697 = vstv %s696
        %vm698 = vcmp.eq.s32.totalorder %v302, %v697
        %vm699 = vcmp.eq.s32.totalorder %v303, %v697
        %vm700 = vmor %vm693, %vm698
        %vm701 = vmor %vm694, %vm699
        %s702 = sadd.s32 %s669, 5
        %s703 = sld [smem:[#allocation5 + %s702]]
        %v704 = vstv %s703
        %vm705 = vcmp.eq.s32.totalorder %v302, %v704
        %vm706 = vcmp.eq.s32.totalorder %v303, %v704
        %vm707 = vmor %vm700, %vm705
        %vm708 = vmor %vm701, %vm706
        %v709 = vsel %vm707, 1, 0
        %v710 = vsel %vm708, 1, 0
        %vm711 = vcmp.eq.s32.totalorder %v709, 1
        %vm712 = vcmp.eq.s32.totalorder %v710, 1
        %v713 = vsel %vm711, %v297, 0.0
        %v714 = vsel %vm712, %v298, 0.0
        %v715 = vmax.f32 %v713, %v714
        %v716 = vrot.slane %v715, 4
        %v717 = vmax.f32 %v715, %v716
        %v718 = vrot.slane %v717, 2
        %v719 = vmax.f32 %v717, %v718
        %v720 = vrot.slane %v719, 1
        %v721 = vmax.f32 %v719, %v720
        %s722 = smul.u32 %s668, 4
        %s723 = sld [smem:[#allocation6 + %s722]]
        %v724 = vstv %s723
        %vm725 = vcmp.eq.s32.totalorder %v302, %v724
        %s726 = sadd.s32 %s722, 1
        %s727 = sld [smem:[#allocation6 + %s726]]
        %v728 = vstv %s727
        %vm729 = vcmp.eq.s32.totalorder %v302, %v728
        %vm730 = vmor %vm725, %vm729
        %s731 = sadd.s32 %s722, 2
        %s732 = sld [smem:[#allocation6 + %s731]]
        %v733 = vstv %s732
        %vm734 = vcmp.eq.s32.totalorder %v302, %v733
        %vm735 = vmor %vm730, %vm734
        %s736 = sadd.s32 %s722, 3
        %s737 = sld [smem:[#allocation6 + %s736]]
        %v738 = vstv %s737
        %vm739 = vcmp.eq.s32.totalorder %v302, %v738
        %vm740 = vmor %vm735, %vm739
        %v741 = vsel %vm740, 1, 0
        %vm742 = vcmp.eq.s32.totalorder %v741, 1
        %v743 = vsel %vm742, %v299, 0.0
        %v744 = vrot.slane %v743, 4
        %v745 = vmax.f32 %v743, %v744
        %v746 = vrot.slane %v745, 2
        %v747 = vmax.f32 %v745, %v746
        %v748 = vrot.slane %v747, 1
        %v749 = vmax.f32 %v747, %v748
        %s750 = sld [smem:[#allocation7 + %s722]]
        %v751 = vstv %s750
        %vm752 = vcmp.eq.s32.totalorder %v302, %v751
        %s753 = sld [smem:[#allocation7 + %s726]]
        %v754 = vstv %s753
        %vm755 = vcmp.eq.s32.totalorder %v302, %v754
        %vm756 = vmor %vm752, %vm755
        %s757 = sld [smem:[#allocation7 + %s731]]
        %v758 = vstv %s757
        %vm759 = vcmp.eq.s32.totalorder %v302, %v758
        %vm760 = vmor %vm756, %vm759
        %s761 = sld [smem:[#allocation7 + %s736]]
        %v762 = vstv %s761
        %vm763 = vcmp.eq.s32.totalorder %v302, %v762
        %vm764 = vmor %vm760, %vm763
        %v765 = vsel %vm764, 1, 0
        %vm766 = vcmp.eq.s32.totalorder %v765, 1
        %v767 = vsel %vm766, %v300, 0.0
        %v768 = vrot.slane %v767, 4
        %v769 = vmax.f32 %v767, %v768
        %v770 = vrot.slane %v769, 2
        %v771 = vmax.f32 %v769, %v770
        %v772 = vrot.slane %v771, 1
        %v773 = vmax.f32 %v771, %v772
        %vm774 = vcmp.lt.f32.partialorder %v721, %v409
        %vm775 = vcmp.lt.f32.partialorder %v749, %v411
        %vm776 = vmand %vm774, %vm775
        %vm777 = vcmp.lt.f32.partialorder %v773, %v414
        %vm778 = vmand %vm776, %vm777
        %vm779 = vcmp.gt.f32.partialorder %v721, %v417
        %vm780 = vcmp.gt.f32.partialorder %v749, %v419
        %vm781 = vmor %vm779, %vm780
        %vm782 = vcmp.gt.f32.partialorder %v773, %v422
        %vm783 = vmor %vm781, %vm782
        %v784 = vsel %vm783, %v425, 0.0
        %v785 = vsel %vm778, %v427, %v784
        %786 = vst [vmem:[#allocation2 + $0x3] sm:$0x1] %v785
        %s787 = sadd.s32 %s288, 4
        %s788 = smul.u32 %s787, 6
        %s789 = sld [smem:[#allocation5 + %s788]]
        %v790 = vstv %s789
        %vm791 = vcmp.eq.s32.totalorder %v302, %v790
        %vm792 = vcmp.eq.s32.totalorder %v303, %v790
        %s793 = sadd.s32 %s788, 1
        %s794 = sld [smem:[#allocation5 + %s793]]
        %v795 = vstv %s794
        %vm796 = vcmp.eq.s32.totalorder %v302, %v795
        %vm797 = vcmp.eq.s32.totalorder %v303, %v795
        %vm798 = vmor %vm791, %vm796
        %vm799 = vmor %vm792, %vm797
        %s800 = sadd.s32 %s788, 2
        %s801 = sld [smem:[#allocation5 + %s800]]
        %v802 = vstv %s801
        %vm803 = vcmp.eq.s32.totalorder %v302, %v802
        %vm804 = vcmp.eq.s32.totalorder %v303, %v802
        %vm805 = vmor %vm798, %vm803
        %vm806 = vmor %vm799, %vm804
        %s807 = sadd.s32 %s788, 3
        %s808 = sld [smem:[#allocation5 + %s807]]
        %v809 = vstv %s808
        %vm810 = vcmp.eq.s32.totalorder %v302, %v809
        %vm811 = vcmp.eq.s32.totalorder %v303, %v809
        %vm812 = vmor %vm805, %vm810
        %vm813 = vmor %vm806, %vm811
        %s814 = sadd.s32 %s788, 4
        %s815 = sld [smem:[#allocation5 + %s814]]
        %v816 = vstv %s815
        %vm817 = vcmp.eq.s32.totalorder %v302, %v816
        %vm818 = vcmp.eq.s32.totalorder %v303, %v816
        %vm819 = vmor %vm812, %vm817
        %vm820 = vmor %vm813, %vm818
        %s821 = sadd.s32 %s788, 5
        %s822 = sld [smem:[#allocation5 + %s821]]
        %v823 = vstv %s822
        %vm824 = vcmp.eq.s32.totalorder %v302, %v823
        %vm825 = vcmp.eq.s32.totalorder %v303, %v823
        %vm826 = vmor %vm819, %vm824
        %vm827 = vmor %vm820, %vm825
        %v828 = vsel %vm826, 1, 0
        %v829 = vsel %vm827, 1, 0
        %vm830 = vcmp.eq.s32.totalorder %v828, 1
        %vm831 = vcmp.eq.s32.totalorder %v829, 1
        %v832 = vsel %vm830, %v297, 0.0
        %v833 = vsel %vm831, %v298, 0.0
        %v834 = vmax.f32 %v832, %v833
        %v835 = vrot.slane %v834, 4
        %v836 = vmax.f32 %v834, %v835
        %v837 = vrot.slane %v836, 2
        %v838 = vmax.f32 %v836, %v837
        %v839 = vrot.slane %v838, 1
        %v840 = vmax.f32 %v838, %v839
        %s841 = smul.u32 %s787, 4
        %s842 = sld [smem:[#allocation6 + %s841]]
        %v843 = vstv %s842
        %vm844 = vcmp.eq.s32.totalorder %v302, %v843
        %s845 = sadd.s32 %s841, 1
        %s846 = sld [smem:[#allocation6 + %s845]]
        %v847 = vstv %s846
        %vm848 = vcmp.eq.s32.totalorder %v302, %v847
        %vm849 = vmor %vm844, %vm848
        %s850 = sadd.s32 %s841, 2
        %s851 = sld [smem:[#allocation6 + %s850]]
        %v852 = vstv %s851
        %vm853 = vcmp.eq.s32.totalorder %v302, %v852
        %vm854 = vmor %vm849, %vm853
        %s855 = sadd.s32 %s841, 3
        %s856 = sld [smem:[#allocation6 + %s855]]
        %v857 = vstv %s856
        %vm858 = vcmp.eq.s32.totalorder %v302, %v857
        %vm859 = vmor %vm854, %vm858
        %v860 = vsel %vm859, 1, 0
        %vm861 = vcmp.eq.s32.totalorder %v860, 1
        %v862 = vsel %vm861, %v299, 0.0
        %v863 = vrot.slane %v862, 4
        %v864 = vmax.f32 %v862, %v863
        %v865 = vrot.slane %v864, 2
        %v866 = vmax.f32 %v864, %v865
        %v867 = vrot.slane %v866, 1
        %v868 = vmax.f32 %v866, %v867
        %s869 = sld [smem:[#allocation7 + %s841]]
        %v870 = vstv %s869
        %vm871 = vcmp.eq.s32.totalorder %v302, %v870
        %s872 = sld [smem:[#allocation7 + %s845]]
        %v873 = vstv %s872
        %vm874 = vcmp.eq.s32.totalorder %v302, %v873
        %vm875 = vmor %vm871, %vm874
        %s876 = sld [smem:[#allocation7 + %s850]]
        %v877 = vstv %s876
        %vm878 = vcmp.eq.s32.totalorder %v302, %v877
        %vm879 = vmor %vm875, %vm878
        %s880 = sld [smem:[#allocation7 + %s855]]
        %v881 = vstv %s880
        %vm882 = vcmp.eq.s32.totalorder %v302, %v881
        %vm883 = vmor %vm879, %vm882
        %v884 = vsel %vm883, 1, 0
        %vm885 = vcmp.eq.s32.totalorder %v884, 1
        %v886 = vsel %vm885, %v300, 0.0
        %v887 = vrot.slane %v886, 4
        %v888 = vmax.f32 %v886, %v887
        %v889 = vrot.slane %v888, 2
        %v890 = vmax.f32 %v888, %v889
        %v891 = vrot.slane %v890, 1
        %v892 = vmax.f32 %v890, %v891
        %vm893 = vcmp.lt.f32.partialorder %v840, %v409
        %vm894 = vcmp.lt.f32.partialorder %v868, %v411
        %vm895 = vmand %vm893, %vm894
        %vm896 = vcmp.lt.f32.partialorder %v892, %v414
        %vm897 = vmand %vm895, %vm896
        %vm898 = vcmp.gt.f32.partialorder %v840, %v417
        %vm899 = vcmp.gt.f32.partialorder %v868, %v419
        %vm900 = vmor %vm898, %vm899
        %vm901 = vcmp.gt.f32.partialorder %v892, %v422
        %vm902 = vmor %vm900, %vm901
        %v903 = vsel %vm902, %v425, 0.0
        %v904 = vsel %vm897, %v427, %v903
        %905 = vst [vmem:[#allocation2 + $0x4] sm:$0x1] %v904
        %s906 = sadd.s32 %s288, 5
        %s907 = smul.u32 %s906, 6
        %s908 = sld [smem:[#allocation5 + %s907]]
        %v909 = vstv %s908
        %vm910 = vcmp.eq.s32.totalorder %v302, %v909
        %vm911 = vcmp.eq.s32.totalorder %v303, %v909
        %s912 = sadd.s32 %s907, 1
        %s913 = sld [smem:[#allocation5 + %s912]]
        %v914 = vstv %s913
        %vm915 = vcmp.eq.s32.totalorder %v302, %v914
        %vm916 = vcmp.eq.s32.totalorder %v303, %v914
        %vm917 = vmor %vm910, %vm915
        %vm918 = vmor %vm911, %vm916
        %s919 = sadd.s32 %s907, 2
        %s920 = sld [smem:[#allocation5 + %s919]]
        %v921 = vstv %s920
        %vm922 = vcmp.eq.s32.totalorder %v302, %v921
        %vm923 = vcmp.eq.s32.totalorder %v303, %v921
        %vm924 = vmor %vm917, %vm922
        %vm925 = vmor %vm918, %vm923
        %s926 = sadd.s32 %s907, 3
        %s927 = sld [smem:[#allocation5 + %s926]]
        %v928 = vstv %s927
        %vm929 = vcmp.eq.s32.totalorder %v302, %v928
        %vm930 = vcmp.eq.s32.totalorder %v303, %v928
        %vm931 = vmor %vm924, %vm929
        %vm932 = vmor %vm925, %vm930
        %s933 = sadd.s32 %s907, 4
        %s934 = sld [smem:[#allocation5 + %s933]]
        %v935 = vstv %s934
        %vm936 = vcmp.eq.s32.totalorder %v302, %v935
        %vm937 = vcmp.eq.s32.totalorder %v303, %v935
        %vm938 = vmor %vm931, %vm936
        %vm939 = vmor %vm932, %vm937
        %s940 = sadd.s32 %s907, 5
        %s941 = sld [smem:[#allocation5 + %s940]]
        %v942 = vstv %s941
        %vm943 = vcmp.eq.s32.totalorder %v302, %v942
        %vm944 = vcmp.eq.s32.totalorder %v303, %v942
        %vm945 = vmor %vm938, %vm943
        %vm946 = vmor %vm939, %vm944
        %v947 = vsel %vm945, 1, 0
        %v948 = vsel %vm946, 1, 0
        %vm949 = vcmp.eq.s32.totalorder %v947, 1
        %vm950 = vcmp.eq.s32.totalorder %v948, 1
        %v951 = vsel %vm949, %v297, 0.0
        %v952 = vsel %vm950, %v298, 0.0
        %v953 = vmax.f32 %v951, %v952
        %v954 = vrot.slane %v953, 4
        %v955 = vmax.f32 %v953, %v954
        %v956 = vrot.slane %v955, 2
        %v957 = vmax.f32 %v955, %v956
        %v958 = vrot.slane %v957, 1
        %v959 = vmax.f32 %v957, %v958
        %s960 = smul.u32 %s906, 4
        %s961 = sld [smem:[#allocation6 + %s960]]
        %v962 = vstv %s961
        %vm963 = vcmp.eq.s32.totalorder %v302, %v962
        %s964 = sadd.s32 %s960, 1
        %s965 = sld [smem:[#allocation6 + %s964]]
        %v966 = vstv %s965
        %vm967 = vcmp.eq.s32.totalorder %v302, %v966
        %vm968 = vmor %vm963, %vm967
        %s969 = sadd.s32 %s960, 2
        %s970 = sld [smem:[#allocation6 + %s969]]
        %v971 = vstv %s970
        %vm972 = vcmp.eq.s32.totalorder %v302, %v971
        %vm973 = vmor %vm968, %vm972
        %s974 = sadd.s32 %s960, 3
        %s975 = sld [smem:[#allocation6 + %s974]]
        %v976 = vstv %s975
        %vm977 = vcmp.eq.s32.totalorder %v302, %v976
        %vm978 = vmor %vm973, %vm977
        %v979 = vsel %vm978, 1, 0
        %vm980 = vcmp.eq.s32.totalorder %v979, 1
        %v981 = vsel %vm980, %v299, 0.0
        %v982 = vrot.slane %v981, 4
        %v983 = vmax.f32 %v981, %v982
        %v984 = vrot.slane %v983, 2
        %v985 = vmax.f32 %v983, %v984
        %v986 = vrot.slane %v985, 1
        %v987 = vmax.f32 %v985, %v986
        %s988 = sld [smem:[#allocation7 + %s960]]
        %v989 = vstv %s988
        %vm990 = vcmp.eq.s32.totalorder %v302, %v989
        %s991 = sld [smem:[#allocation7 + %s964]]
        %v992 = vstv %s991
        %vm993 = vcmp.eq.s32.totalorder %v302, %v992
        %vm994 = vmor %vm990, %vm993
        %s995 = sld [smem:[#allocation7 + %s969]]
        %v996 = vstv %s995
        %vm997 = vcmp.eq.s32.totalorder %v302, %v996
        %vm998 = vmor %vm994, %vm997
        %s999 = sld [smem:[#allocation7 + %s974]]
        %v1000 = vstv %s999
        %vm1001 = vcmp.eq.s32.totalorder %v302, %v1000
        %vm1002 = vmor %vm998, %vm1001
        %v1003 = vsel %vm1002, 1, 0
        %vm1004 = vcmp.eq.s32.totalorder %v1003, 1
        %v1005 = vsel %vm1004, %v300, 0.0
        %v1006 = vrot.slane %v1005, 4
        %v1007 = vmax.f32 %v1005, %v1006
        %v1008 = vrot.slane %v1007, 2
        %v1009 = vmax.f32 %v1007, %v1008
        %v1010 = vrot.slane %v1009, 1
        %v1011 = vmax.f32 %v1009, %v1010
        %vm1012 = vcmp.lt.f32.partialorder %v959, %v409
        %vm1013 = vcmp.lt.f32.partialorder %v987, %v411
        %vm1014 = vmand %vm1012, %vm1013
        %vm1015 = vcmp.lt.f32.partialorder %v1011, %v414
        %vm1016 = vmand %vm1014, %vm1015
        %vm1017 = vcmp.gt.f32.partialorder %v959, %v417
        %vm1018 = vcmp.gt.f32.partialorder %v987, %v419
        %vm1019 = vmor %vm1017, %vm1018
        %vm1020 = vcmp.gt.f32.partialorder %v1011, %v422
        %vm1021 = vmor %vm1019, %vm1020
        %v1022 = vsel %vm1021, %v425, 0.0
        %v1023 = vsel %vm1016, %v427, %v1022
        %1024 = vst [vmem:[#allocation2 + $0x5] sm:$0x1] %v1023
        %s1025 = sadd.s32 %s288, 6
        %s1026 = smul.u32 %s1025, 6
        %s1027 = sld [smem:[#allocation5 + %s1026]]
        %v1028 = vstv %s1027
        %vm1029 = vcmp.eq.s32.totalorder %v302, %v1028
        %vm1030 = vcmp.eq.s32.totalorder %v303, %v1028
        %s1031 = sadd.s32 %s1026, 1
        %s1032 = sld [smem:[#allocation5 + %s1031]]
        %v1033 = vstv %s1032
        %vm1034 = vcmp.eq.s32.totalorder %v302, %v1033
        %vm1035 = vcmp.eq.s32.totalorder %v303, %v1033
        %vm1036 = vmor %vm1029, %vm1034
        %vm1037 = vmor %vm1030, %vm1035
        %s1038 = sadd.s32 %s1026, 2
        %s1039 = sld [smem:[#allocation5 + %s1038]]
        %v1040 = vstv %s1039
        %vm1041 = vcmp.eq.s32.totalorder %v302, %v1040
        %vm1042 = vcmp.eq.s32.totalorder %v303, %v1040
        %vm1043 = vmor %vm1036, %vm1041
        %vm1044 = vmor %vm1037, %vm1042
        %s1045 = sadd.s32 %s1026, 3
        %s1046 = sld [smem:[#allocation5 + %s1045]]
        %v1047 = vstv %s1046
        %vm1048 = vcmp.eq.s32.totalorder %v302, %v1047
        %vm1049 = vcmp.eq.s32.totalorder %v303, %v1047
        %vm1050 = vmor %vm1043, %vm1048
        %vm1051 = vmor %vm1044, %vm1049
        %s1052 = sadd.s32 %s1026, 4
        %s1053 = sld [smem:[#allocation5 + %s1052]]
        %v1054 = vstv %s1053
        %vm1055 = vcmp.eq.s32.totalorder %v302, %v1054
        %vm1056 = vcmp.eq.s32.totalorder %v303, %v1054
        %vm1057 = vmor %vm1050, %vm1055
        %vm1058 = vmor %vm1051, %vm1056
        %s1059 = sadd.s32 %s1026, 5
        %s1060 = sld [smem:[#allocation5 + %s1059]]
        %v1061 = vstv %s1060
        %vm1062 = vcmp.eq.s32.totalorder %v302, %v1061
        %vm1063 = vcmp.eq.s32.totalorder %v303, %v1061
        %vm1064 = vmor %vm1057, %vm1062
        %vm1065 = vmor %vm1058, %vm1063
        %v1066 = vsel %vm1064, 1, 0
        %v1067 = vsel %vm1065, 1, 0
        %vm1068 = vcmp.eq.s32.totalorder %v1066, 1
        %vm1069 = vcmp.eq.s32.totalorder %v1067, 1
        %v1070 = vsel %vm1068, %v297, 0.0
        %v1071 = vsel %vm1069, %v298, 0.0
        %v1072 = vmax.f32 %v1070, %v1071
        %v1073 = vrot.slane %v1072, 4
        %v1074 = vmax.f32 %v1072, %v1073
        %v1075 = vrot.slane %v1074, 2
        %v1076 = vmax.f32 %v1074, %v1075
        %v1077 = vrot.slane %v1076, 1
        %v1078 = vmax.f32 %v1076, %v1077
        %s1079 = smul.u32 %s1025, 4
        %s1080 = sld [smem:[#allocation6 + %s1079]]
        %v1081 = vstv %s1080
        %vm1082 = vcmp.eq.s32.totalorder %v302, %v1081
        %s1083 = sadd.s32 %s1079, 1
        %s1084 = sld [smem:[#allocation6 + %s1083]]
        %v1085 = vstv %s1084
        %vm1086 = vcmp.eq.s32.totalorder %v302, %v1085
        %vm1087 = vmor %vm1082, %vm1086
        %s1088 = sadd.s32 %s1079, 2
        %s1089 = sld [smem:[#allocation6 + %s1088]]
        %v1090 = vstv %s1089
        %vm1091 = vcmp.eq.s32.totalorder %v302, %v1090
        %vm1092 = vmor %vm1087, %vm1091
        %s1093 = sadd.s32 %s1079, 3
        %s1094 = sld [smem:[#allocation6 + %s1093]]
        %v1095 = vstv %s1094
        %vm1096 = vcmp.eq.s32.totalorder %v302, %v1095
        %vm1097 = vmor %vm1092, %vm1096
        %v1098 = vsel %vm1097, 1, 0
        %vm1099 = vcmp.eq.s32.totalorder %v1098, 1
        %v1100 = vsel %vm1099, %v299, 0.0
        %v1101 = vrot.slane %v1100, 4
        %v1102 = vmax.f32 %v1100, %v1101
        %v1103 = vrot.slane %v1102, 2
        %v1104 = vmax.f32 %v1102, %v1103
        %v1105 = vrot.slane %v1104, 1
        %v1106 = vmax.f32 %v1104, %v1105
        %s1107 = sld [smem:[#allocation7 + %s1079]]
        %v1108 = vstv %s1107
        %vm1109 = vcmp.eq.s32.totalorder %v302, %v1108
        %s1110 = sld [smem:[#allocation7 + %s1083]]
        %v1111 = vstv %s1110
        %vm1112 = vcmp.eq.s32.totalorder %v302, %v1111
        %vm1113 = vmor %vm1109, %vm1112
        %s1114 = sld [smem:[#allocation7 + %s1088]]
        %v1115 = vstv %s1114
        %vm1116 = vcmp.eq.s32.totalorder %v302, %v1115
        %vm1117 = vmor %vm1113, %vm1116
        %s1118 = sld [smem:[#allocation7 + %s1093]]
        %v1119 = vstv %s1118
        %vm1120 = vcmp.eq.s32.totalorder %v302, %v1119
        %vm1121 = vmor %vm1117, %vm1120
        %v1122 = vsel %vm1121, 1, 0
        %vm1123 = vcmp.eq.s32.totalorder %v1122, 1
        %v1124 = vsel %vm1123, %v300, 0.0
        %v1125 = vrot.slane %v1124, 4
        %v1126 = vmax.f32 %v1124, %v1125
        %v1127 = vrot.slane %v1126, 2
        %v1128 = vmax.f32 %v1126, %v1127
        %v1129 = vrot.slane %v1128, 1
        %v1130 = vmax.f32 %v1128, %v1129
        %vm1131 = vcmp.lt.f32.partialorder %v1078, %v409
        %vm1132 = vcmp.lt.f32.partialorder %v1106, %v411
        %vm1133 = vmand %vm1131, %vm1132
        %vm1134 = vcmp.lt.f32.partialorder %v1130, %v414
        %vm1135 = vmand %vm1133, %vm1134
        %vm1136 = vcmp.gt.f32.partialorder %v1078, %v417
        %vm1137 = vcmp.gt.f32.partialorder %v1106, %v419
        %vm1138 = vmor %vm1136, %vm1137
        %vm1139 = vcmp.gt.f32.partialorder %v1130, %v422
        %vm1140 = vmor %vm1138, %vm1139
        %v1141 = vsel %vm1140, %v425, 0.0
        %v1142 = vsel %vm1135, %v427, %v1141
        %1143 = vst [vmem:[#allocation2 + $0x6] sm:$0x1] %v1142
        %s1144 = sadd.s32 %s288, 7
        %s1145 = smul.u32 %s1144, 6
        %s1146 = sld [smem:[#allocation5 + %s1145]]
        %v1147 = vstv %s1146
        %vm1148 = vcmp.eq.s32.totalorder %v302, %v1147
        %vm1149 = vcmp.eq.s32.totalorder %v303, %v1147
        %s1150 = sadd.s32 %s1145, 1
        %s1151 = sld [smem:[#allocation5 + %s1150]]
        %v1152 = vstv %s1151
        %vm1153 = vcmp.eq.s32.totalorder %v302, %v1152
        %vm1154 = vcmp.eq.s32.totalorder %v303, %v1152
        %vm1155 = vmor %vm1148, %vm1153
        %vm1156 = vmor %vm1149, %vm1154
        %s1157 = sadd.s32 %s1145, 2
        %s1158 = sld [smem:[#allocation5 + %s1157]]
        %v1159 = vstv %s1158
        %vm1160 = vcmp.eq.s32.totalorder %v302, %v1159
        %vm1161 = vcmp.eq.s32.totalorder %v303, %v1159
        %vm1162 = vmor %vm1155, %vm1160
        %vm1163 = vmor %vm1156, %vm1161
        %s1164 = sadd.s32 %s1145, 3
        %s1165 = sld [smem:[#allocation5 + %s1164]]
        %v1166 = vstv %s1165
        %vm1167 = vcmp.eq.s32.totalorder %v302, %v1166
        %vm1168 = vcmp.eq.s32.totalorder %v303, %v1166
        %vm1169 = vmor %vm1162, %vm1167
        %vm1170 = vmor %vm1163, %vm1168
        %s1171 = sadd.s32 %s1145, 4
        %s1172 = sld [smem:[#allocation5 + %s1171]]
        %v1173 = vstv %s1172
        %vm1174 = vcmp.eq.s32.totalorder %v302, %v1173
        %vm1175 = vcmp.eq.s32.totalorder %v303, %v1173
        %vm1176 = vmor %vm1169, %vm1174
        %vm1177 = vmor %vm1170, %vm1175
        %s1178 = sadd.s32 %s1145, 5
        %s1179 = sld [smem:[#allocation5 + %s1178]]
        %v1180 = vstv %s1179
        %vm1181 = vcmp.eq.s32.totalorder %v302, %v1180
        %vm1182 = vcmp.eq.s32.totalorder %v303, %v1180
        %vm1183 = vmor %vm1176, %vm1181
        %vm1184 = vmor %vm1177, %vm1182
        %v1185 = vsel %vm1183, 1, 0
        %v1186 = vsel %vm1184, 1, 0
        %vm1187 = vcmp.eq.s32.totalorder %v1185, 1
        %vm1188 = vcmp.eq.s32.totalorder %v1186, 1
        %v1189 = vsel %vm1187, %v297, 0.0
        %v1190 = vsel %vm1188, %v298, 0.0
        %v1191 = vmax.f32 %v1189, %v1190
        %v1192 = vrot.slane %v1191, 4
        %v1193 = vmax.f32 %v1191, %v1192
        %v1194 = vrot.slane %v1193, 2
        %v1195 = vmax.f32 %v1193, %v1194
        %v1196 = vrot.slane %v1195, 1
        %v1197 = vmax.f32 %v1195, %v1196
        %s1198 = smul.u32 %s1144, 4
        %s1199 = sld [smem:[#allocation6 + %s1198]]
        %v1200 = vstv %s1199
        %vm1201 = vcmp.eq.s32.totalorder %v302, %v1200
        %s1202 = sadd.s32 %s1198, 1
        %s1203 = sld [smem:[#allocation6 + %s1202]]
        %v1204 = vstv %s1203
        %vm1205 = vcmp.eq.s32.totalorder %v302, %v1204
        %vm1206 = vmor %vm1201, %vm1205
        %s1207 = sadd.s32 %s1198, 2
        %s1208 = sld [smem:[#allocation6 + %s1207]]
        %v1209 = vstv %s1208
        %vm1210 = vcmp.eq.s32.totalorder %v302, %v1209
        %vm1211 = vmor %vm1206, %vm1210
        %s1212 = sadd.s32 %s1198, 3
        %s1213 = sld [smem:[#allocation6 + %s1212]]
        %v1214 = vstv %s1213
        %vm1215 = vcmp.eq.s32.totalorder %v302, %v1214
        %vm1216 = vmor %vm1211, %vm1215
        %v1217 = vsel %vm1216, 1, 0
        %vm1218 = vcmp.eq.s32.totalorder %v1217, 1
        %v1219 = vsel %vm1218, %v299, 0.0
        %v1220 = vrot.slane %v1219, 4
        %v1221 = vmax.f32 %v1219, %v1220
        %v1222 = vrot.slane %v1221, 2
        %v1223 = vmax.f32 %v1221, %v1222
        %v1224 = vrot.slane %v1223, 1
        %v1225 = vmax.f32 %v1223, %v1224
        %s1226 = sld [smem:[#allocation7 + %s1198]]
        %v1227 = vstv %s1226
        %vm1228 = vcmp.eq.s32.totalorder %v302, %v1227
        %s1229 = sld [smem:[#allocation7 + %s1202]]
        %v1230 = vstv %s1229
        %vm1231 = vcmp.eq.s32.totalorder %v302, %v1230
        %vm1232 = vmor %vm1228, %vm1231
        %s1233 = sld [smem:[#allocation7 + %s1207]]
        %v1234 = vstv %s1233
        %vm1235 = vcmp.eq.s32.totalorder %v302, %v1234
        %vm1236 = vmor %vm1232, %vm1235
        %s1237 = sld [smem:[#allocation7 + %s1212]]
        %v1238 = vstv %s1237
        %vm1239 = vcmp.eq.s32.totalorder %v302, %v1238
        %vm1240 = vmor %vm1236, %vm1239
        %v1241 = vsel %vm1240, 1, 0
        %vm1242 = vcmp.eq.s32.totalorder %v1241, 1
        %v1243 = vsel %vm1242, %v300, 0.0
        %v1244 = vrot.slane %v1243, 4
        %v1245 = vmax.f32 %v1243, %v1244
        %v1246 = vrot.slane %v1245, 2
        %v1247 = vmax.f32 %v1245, %v1246
        %v1248 = vrot.slane %v1247, 1
        %v1249 = vmax.f32 %v1247, %v1248
        %vm1250 = vcmp.lt.f32.partialorder %v1197, %v409
        %vm1251 = vcmp.lt.f32.partialorder %v1225, %v411
        %vm1252 = vmand %vm1250, %vm1251
        %vm1253 = vcmp.lt.f32.partialorder %v1249, %v414
        %vm1254 = vmand %vm1252, %vm1253
        %vm1255 = vcmp.gt.f32.partialorder %v1197, %v417
        %vm1256 = vcmp.gt.f32.partialorder %v1225, %v419
        %vm1257 = vmor %vm1255, %vm1256
        %vm1258 = vcmp.gt.f32.partialorder %v1249, %v422
        %vm1259 = vmor %vm1257, %vm1258
        %v1260 = vsel %vm1259, %v425, 0.0
        %v1261 = vsel %vm1254, %v427, %v1260
        %1262 = vst [vmem:[#allocation2 + $0x7] sm:$0x1] %v1261
        %v1263 = vld [vmem:[%s247] sm:$0xff]
        %v1264 = vld [vmem:[#allocation2] sm:$0xff]
        %v1265 = vadd.f32 %v1263, %v1264
        %1266 = vst [vmem:[%s287] sm:$0xff] %v1265
        %s1267 = sand.u32 %s147, 1
        %s1268 = scalar_lea.sflag [#allocation10], %s1267
        %s1269 = sand.u32 %s147, 1
        %s1270 = smul.addr %s1269, 8
        %s1271 = scalar_lea.vmem [#allocation16], %s1270
        // Predicated region
        $region53: #{tpu_custom_call.1} parent=35 // pred_check
          %p1272 = pneg %p157
        $region54: #{tpu_custom_call.1} parent=35 // pred_check_branch
          %1274 = sbr.rel (%p1272) target = $region56
        $region55: #{tpu_custom_call.1} parent=35 // pred_region
          %1276 = vsyncadd %s1268, 0
          %s1277 = smul.addr %s50, 8
          %s1278 = scalar_lea.hbm %s8, %s1277
          %s1280 = sshll.u32 %s1271, 4
          %s1281 = int_to_ptr.vmem [resolvable:$true] %s1280
          %s1282 = sshll.u32 %s1278, 4
          %s1283 = int_to_ptr.hbm [resolvable:$true] %s1282
          %1285 = dma.vmem_to_hbm [thread:$0]  %s1281, 128, %s1283, %s1268
        $region56: #{tpu_custom_call.1} parent=35 // pred_fallthru
          _
      $region36: #{tpu_custom_call.1} parent=5 // pred_fallthru
        _
      %p1286 = scmp.le.s32.totalorder 2, %s45
      // Predicated region
      $region57: #{tpu_custom_call.1} parent=5 // pred_check
        %p1287 = pneg %p1286
      $region58: #{tpu_custom_call.1} parent=5 // pred_check_branch
        %1289 = sbr.rel (%p1287) target = $region60
      $region59: #{tpu_custom_call.1} parent=5 // pred_region
        %s1290 = ssub.s32 %s45, 2
        // Predicated region
        $region61: #{tpu_custom_call.1} parent=59 // pred_check
          %p1291 = pneg %p163
        $region62: #{tpu_custom_call.1} parent=59 // pred_check_branch
          %1293 = sbr.rel (%p1291) target = $region64
        $region63: #{tpu_custom_call.1} parent=59 // pred_region
          %s1294 = sand.u32 %s148, 1
          %s1295 = scalar_lea.sflag [#allocation10], %s1294
          %s1296 = sand.u32 %s148, 1
          %s1297 = smul.addr %s1296, 8
          %s1298 = scalar_lea.vmem [#allocation16], %s1297
          %1300 = dma.done %s1295, 128
        $region64: #{tpu_custom_call.1} parent=59 // pred_fallthru
          _
      $region60: #{tpu_custom_call.1} parent=5 // pred_fallthru
        _
    $region6: #{tpu_custom_call.1} parent=1 // loop_footer
      %s49 = sadd.s32 1, %s45
    $region7: #{tpu_custom_call.1} parent=1 // loop_footer_branch
      %44 = sbr.rel target = $region3
    $region8: #{tpu_custom_call.1} parent=1 // loop_exit
      _
    %1301 = vsyncpa [#allocation9], 1
    %s1302 = scalar_lea.sflag [#allocation9], 1
    %1303 = vsyncpa %s1302, 1
    %1304 = vsyncpa [#allocation12], 1
    %1305 = vsyncpa [#allocation15], 1
    %1306 = vsyncpa [#allocation10], 1
    %s1307 = scalar_lea.sflag [#allocation10], 1
    %1308 = vsyncpa %s1307, 1

</llo_original>
